<compile_context>
chip_gen: v7x
topology: tpu7x:2x2x1
jax: 0.10.0
libtpu: 0.0.40
codegen_flags: <defaults>
</compile_context>

<pallas_src>
import jax
import jax.numpy as jnp
from jax import lax
from jax.experimental import pallas as pl
from jax.experimental.pallas import tpu as pltpu

HIDDEN = 512        # width of the three Linear layers
N_CGAN = 10         # CGAN head output width (Linear(512+nc, 10))
HEAD_LANES = 128    # fused-head lane width (1 GAN col + 10 CGAN cols, zero padded)


def _round_up(x, m):
    return ((x + m - 1) // m) * m


def _leaky_relu(v, slope=0.2):
    return jnp.where(v > 0, v, slope * v)


def discriminator_kernel(
    x_ref,            # (TB, IN_pad)    f32   flattened image tile (bf16 cast in-kernel)
    lbl_ref,          # (TB, 1)         int32 class label per example
    w1_ref, b1_ref,   # (IN_pad, 512) bf16, (1, 512) f32
    w2_ref, b2_ref,   # (512, 512)    bf16, (1, 512) f32
    w3_ref, b3_ref,   # (512, 512)    bf16, (1, 512) f32
    wh_ref,           # (512, 128)    bf16  fused [wg | wch | 0] head weight
    cb_ref,           # (NCLS_pad, 128) f32  per-class head bias: [bg | emb@wce+bc | 0]
    out_ref,          # (TB, 128)     bf16  col0=sigmoid(gan), cols1..10=softmax(cgan)
):
    f32 = jnp.float32
    bf16 = jnp.bfloat16
    tb = x_ref.shape[0]
    ncls_pad = cb_ref.shape[0]

    # model1: three Linear + LeakyReLU(0.2) blocks (Dropout = identity at eval).
    x = x_ref[...].astype(bf16)                                   # VPU cast, f32 HBM read
    h = jnp.dot(x, w1_ref[...], preferred_element_type=f32) + b1_ref[...]
    h = _leaky_relu(h)
    h = jnp.dot(h.astype(bf16), w2_ref[...], preferred_element_type=f32) + b2_ref[...]
    h = _leaky_relu(h)
    h = jnp.dot(h.astype(bf16), w3_ref[...], preferred_element_type=f32) + b3_ref[...]
    h = _leaky_relu(h)

    # Per-example fused head bias: exact one-hot gather from the resident class
    # table (0/1 weights -> MXU gather is exact row selection).
    onehot = (lbl_ref[...] ==
              lax.broadcasted_iota(jnp.int32, (tb, ncls_pad), 1)).astype(f32)
    bias = jnp.dot(onehot, cb_ref[...], preferred_element_type=f32)       # (TB, 128)

    # Fused heads: one lane-dense (512,128) matmul + per-example bias.
    heads = jnp.dot(h.astype(bf16), wh_ref[...], preferred_element_type=f32) + bias

    col = lax.broadcasted_iota(jnp.int32, heads.shape, 1)

    # GAN head: sigmoid (only column 0 survives the final select).
    gan = jax.nn.sigmoid(heads)

    # CGAN head: numerically-stable softmax over columns 1..10 only.
    valid = (col >= 1) & (col < 1 + N_CGAN)
    logits = jnp.where(valid, heads, -1e30)                   # f32 mask constant
    m = jnp.max(logits, axis=-1, keepdims=True)
    e = jnp.exp(logits - m)                                   # padded cols underflow to 0
    denom = jnp.sum(e, axis=-1, keepdims=True)
    sm = e / denom                                            # EXACT reciprocal (sum==1)

    out_ref[...] = jnp.where(col == 0, gan, sm).astype(out_ref.dtype)


def _pick_tile_b(B):
    """Batch tile: 16-row rounding (bf16 packing), >=2 grid steps for megacore,
    capped at 512 for large batches (amortize ~0.35us/grid-step overhead)."""
    b16 = _round_up(max(B, 16), 16)
    if b16 <= 32:
        return b16
    if b16 <= 1024:
        return _round_up((b16 + 1) // 2, 16)   # at least 2 grid steps (v7x 2 TCs)
    return 512


def discriminator_forward(image, label, params, n_classes):
    """image: (B, C, H, W) float32, label: (B,) int -> (dis_gan (B,1), dis_cgan (B,10))."""
    B = image.shape[0]
    in_features = 1
    for d in image.shape[1:]:
        in_features *= d

    in_pad = _round_up(max(in_features, 128), 128)
    ncls_pad = _round_up(max(n_classes, 8), 8)

    tile_b = _pick_tile_b(B)
    b_pad = _round_up(B, tile_b)

    # x stays f32 (pad only); the bf16 cast happens inside the kernel.
    x = image.reshape(B, in_features).astype(jnp.float32)
    x = jnp.pad(x, ((0, b_pad - B), (0, in_pad - in_features)))

    lbl = jnp.pad(label.astype(jnp.int32).reshape(B, 1), ((0, b_pad - B), (0, 0)))

    # Per-class fused head bias table (hoisted tiny embedding path):
    #   cat([h, emb]) @ Wc + bc == h @ Wc[:512] + (emb @ Wc[512:] + bc)
    class_bias = params["emb"] @ params["wce"] + params["bc"]          # (n_classes, 10)
    cb = jnp.zeros((ncls_pad, HEAD_LANES), jnp.float32)
    cb = cb.at[:, 0:1].set(jnp.broadcast_to(params["bg"], (ncls_pad, 1)))
    cb = cb.at[:n_classes, 1:1 + N_CGAN].set(class_bias)

    # Fuse GAN + CGAN head weights into one lane-dense (512, 128) matrix.
    wh = jnp.zeros((HIDDEN, HEAD_LANES), jnp.float32)
    wh = wh.at[:, 0:1].set(params["wg"])
    wh = wh.at[:, 1:1 + N_CGAN].set(params["wch"])
    wh = wh.astype(jnp.bfloat16)

    w1 = jnp.pad(params["w1"], ((0, in_pad - in_features), (0, 0))).astype(jnp.bfloat16)
    w2 = params["w2"].astype(jnp.bfloat16)
    w3 = params["w3"].astype(jnp.bfloat16)
    b1, b2, b3 = params["b1"], params["b2"], params["b3"]

    grid = (b_pad // tile_b,)
    row = lambda i: (i, 0)      # batch-tiled arrays
    const = lambda i: (0, 0)    # VMEM-resident weights / biases
    resident = pl.Buffered(1)   # constant blocks: single buffer, no wasted 2x VMEM

    in_specs = [
        pl.BlockSpec((tile_b, in_pad), row),
        pl.BlockSpec((tile_b, 1), row),
        pl.BlockSpec((in_pad, HIDDEN), const, pipeline_mode=resident),
        pl.BlockSpec((1, HIDDEN), const, pipeline_mode=resident),
        pl.BlockSpec((HIDDEN, HIDDEN), const, pipeline_mode=resident),
        pl.BlockSpec((1, HIDDEN), const, pipeline_mode=resident),
        pl.BlockSpec((HIDDEN, HIDDEN), const, pipeline_mode=resident),
        pl.BlockSpec((1, HIDDEN), const, pipeline_mode=resident),
        pl.BlockSpec((HIDDEN, HEAD_LANES), const, pipeline_mode=resident),
        pl.BlockSpec((ncls_pad, HEAD_LANES), const, pipeline_mode=resident),
    ]
    out_specs = pl.BlockSpec((tile_b, HEAD_LANES), row)

    # Derived VMEM limit: resident weights (single-buffered) + double-buffered
    # batch-tiled I/O, with ~50% headroom, clamped to a v7x-safe window.
    weight_bytes = ((w1.size + w2.size + w3.size + wh.size) * 2
                    + (b1.size + b2.size + b3.size) * 4 + cb.size * 4)
    io_bytes = 2 * (tile_b * in_pad * 4 + tile_b * 4 + tile_b * HEAD_LANES * 2)
    vmem_limit = int(min(max((weight_bytes + io_bytes) * 3 // 2 + (4 << 20), 16 << 20),
                         56 << 20))

    flops = 2 * b_pad * (in_pad * HIDDEN + 2 * HIDDEN * HIDDEN
                         + HIDDEN * HEAD_LANES + ncls_pad * HEAD_LANES)
    transcendentals = b_pad * 2 * HEAD_LANES
    bytes_accessed = (
        x.size * 4 + lbl.size * 4
        + (w1.size + w2.size + w3.size + wh.size) * 2
        + (b1.size + b2.size + b3.size + cb.size) * 4
        + b_pad * HEAD_LANES * 2
    )

    out = pl.pallas_call(
        discriminator_kernel,
        out_shape=jax.ShapeDtypeStruct((b_pad, HEAD_LANES), jnp.bfloat16),
        grid=grid,
        in_specs=in_specs,
        out_specs=out_specs,
        compiler_params=pltpu.CompilerParams(
            dimension_semantics=("parallel",),
            vmem_limit_bytes=vmem_limit,
        ),
        cost_estimate=pl.CostEstimate(
            flops=flops,
            transcendentals=transcendentals,
            bytes_accessed=bytes_accessed,
        ),
    )(x, lbl, w1, b1, w2, b2, w3, b3, wh, cb)

    dis_gan = out[:B, 0:1].astype(jnp.float32)
    dis_cgan = out[:B, 1:1 + N_CGAN].astype(jnp.float32)
    return dis_gan, dis_cgan


def init_params(key, in_features, n_classes):
    ks = jax.random.split(key, 12)
    s = 0.05
    return {
        "emb": jax.random.normal(ks[0], (n_classes, n_classes), jnp.float32) * s,
        "w1": jax.random.normal(ks[1], (in_features, HIDDEN), jnp.float32) * s,
        "b1": jax.random.normal(ks[2], (1, HIDDEN), jnp.float32) * s,
        "w2": jax.random.normal(ks[3], (HIDDEN, HIDDEN), jnp.float32) * s,
        "b2": jax.random.normal(ks[4], (1, HIDDEN), jnp.float32) * s,
        "w3": jax.random.normal(ks[5], (HIDDEN, HIDDEN), jnp.float32) * s,
        "b3": jax.random.normal(ks[6], (1, HIDDEN), jnp.float32) * s,
        "wg": jax.random.normal(ks[7], (HIDDEN, 1), jnp.float32) * s,
        "bg": jax.random.normal(ks[8], (1, 1), jnp.float32) * s,
        # CGAN head weight (512 + n_classes, 10) split into h-part and emb-part.
        "wch": jax.random.normal(ks[9], (HIDDEN, N_CGAN), jnp.float32) * s,
        "wce": jax.random.normal(ks[10], (n_classes, N_CGAN), jnp.float32) * s,
        "bc": jax.random.normal(ks[11], (1, N_CGAN), jnp.float32) * s,
    }


def reference_forward(image, label, params, matmul_dtype=jnp.float32):
    """Pure-JAX reference of the PyTorch forward (eval mode).
    matmul_dtype=bfloat16 mirrors the kernel's bf16 MXU operands (f32 accumulation)."""
    B = image.shape[0]
    x = image.reshape(B, -1).astype(jnp.float32)

    def mm(a, w):
        return jnp.dot(a.astype(matmul_dtype), w.astype(matmul_dtype),
                       preferred_element_type=jnp.float32)

    h = _leaky_relu(mm(x, params["w1"]) + params["b1"])
    h = _leaky_relu(mm(h, params["w2"]) + params["b2"])
    h = _leaky_relu(mm(h, params["w3"]) + params["b3"])
    dis_gan = jax.nn.sigmoid(mm(h, params["wg"]) + params["bg"])
    emb = params["emb"][label]
    logits = mm(h, params["wch"]) + emb @ params["wce"] + params["bc"]
    dis_cgan = jax.nn.softmax(logits, axis=-1)
    return dis_gan, dis_cgan


if __name__ == "__main__":
    # Small shapes: batch=8, img_shape=(1, 16, 16) -> 256 input features, 10 classes.
    B, C, H, W = 8, 1, 16, 16
    n_classes = 10
    in_features = C * H * W

    key = jax.random.PRNGKey(0)
    k_img, k_lbl, k_par = jax.random.split(key, 3)

    image = jax.random.normal(k_img, (B, C, H, W), jnp.float32)
    label = jax.random.randint(k_lbl, (B,), 0, n_classes, jnp.int32)
    params = init_params(k_par, in_features, n_classes)

    dis_gan, dis_cgan = discriminator_forward(image, label, params, n_classes)
    dis_gan, dis_cgan = jax.block_until_ready((dis_gan, dis_cgan))

    assert dis_gan.shape == (B, 1) and dis_cgan.shape == (B, N_CGAN)

    # Reference with bf16 matmul operands (matches kernel's MXU precision choice).
    ref_gan, ref_cgan = reference_forward(image, label, params, matmul_dtype=jnp.bfloat16)
    assert jnp.allclose(dis_gan, ref_gan, atol=1e-2, rtol=1e-2)
    assert jnp.allclose(dis_cgan, ref_cgan, atol=1e-2, rtol=1e-2)
    # Exact softmax normalization in-kernel; tolerance covers the bf16 output cast.
    assert jnp.allclose(jnp.sum(dis_cgan, axis=-1), 1.0, atol=1e-2)

    # Non-multiple-of-16 batch exercises the batch-padding path.
    B2 = 5
    image2 = jax.random.normal(jax.random.PRNGKey(1), (B2, C, H, W), jnp.float32)
    label2 = jax.random.randint(jax.random.PRNGKey(2), (B2,), 0, n_classes, jnp.int32)
    g2, c2 = jax.block_until_ready(
        discriminator_forward(image2, label2, params, n_classes))
    rg2, rc2 = reference_forward(image2, label2, params, matmul_dtype=jnp.bfloat16)
    assert g2.shape == (B2, 1) and c2.shape == (B2, N_CGAN)
    assert jnp.allclose(g2, rg2, atol=1e-2, rtol=1e-2)
    assert jnp.allclose(c2, rc2, atol=1e-2, rtol=1e-2)

    print("KERNEL_OK")
</pallas_src>

<mosaic_0001>
module attributes {stable_mosaic.version = 11 : i64} {
  func.func @discriminator_kernel(%arg0: i32, %arg1: memref<16x256xf32, #tpu.memory_space<vmem>>, %arg2: memref<16x1xi32, #tpu.memory_space<vmem>>, %arg3: memref<256x512xbf16, #tpu.memory_space<vmem>>, %arg4: memref<1x512xf32, #tpu.memory_space<vmem>>, %arg5: memref<512x512xbf16, #tpu.memory_space<vmem>>, %arg6: memref<1x512xf32, #tpu.memory_space<vmem>>, %arg7: memref<512x512xbf16, #tpu.memory_space<vmem>>, %arg8: memref<1x512xf32, #tpu.memory_space<vmem>>, %arg9: memref<512x128xbf16, #tpu.memory_space<vmem>>, %arg10: memref<16x128xf32, #tpu.memory_space<vmem>>, %arg11: memref<16x128xbf16, #tpu.memory_space<vmem>>) attributes {dimension_semantics = [#tpu.dimension_semantics<parallel>], iteration_bounds = array<i64: 1>, scalar_prefetch = 0 : i64, scratch_operands = 0 : i64, tpu.core_type = #tpu.core_type<tc>, window_params = [{transform_indices = @transform_0, window_bounds = array<i64: 16, 256>}, {transform_indices = @transform_1, window_bounds = array<i64: 16, 1>}, {pipeline_mode = #tpu.pipeline_mode<synchronous>, transform_indices = @transform_2, window_bounds = array<i64: 256, 512>}, {pipeline_mode = #tpu.pipeline_mode<synchronous>, transform_indices = @transform_3, window_bounds = array<i64: 1, 512>}, {pipeline_mode = #tpu.pipeline_mode<synchronous>, transform_indices = @transform_4, window_bounds = array<i64: 512, 512>}, {pipeline_mode = #tpu.pipeline_mode<synchronous>, transform_indices = @transform_5, window_bounds = array<i64: 1, 512>}, {pipeline_mode = #tpu.pipeline_mode<synchronous>, transform_indices = @transform_6, window_bounds = array<i64: 512, 512>}, {pipeline_mode = #tpu.pipeline_mode<synchronous>, transform_indices = @transform_7, window_bounds = array<i64: 1, 512>}, {pipeline_mode = #tpu.pipeline_mode<synchronous>, transform_indices = @transform_8, window_bounds = array<i64: 512, 128>}, {pipeline_mode = #tpu.pipeline_mode<synchronous>, transform_indices = @transform_9, window_bounds = array<i64: 16, 128>}, {transform_indices = @transform_10, window_bounds = array<i64: 16, 128>}]} {
    %c0 = arith.constant 0 : index
    %c0_0 = arith.constant 0 : index
    %0 = vector.load %arg1[%c0, %c0_0] : memref<16x256xf32, #tpu.memory_space<vmem>>, vector<16x256xf32>
    %1 = arith.truncf %0 : vector<16x256xf32> to vector<16x256xbf16>
    %c0_1 = arith.constant 0 : index
    %c0_2 = arith.constant 0 : index
    %2 = vector.load %arg3[%c0_1, %c0_2] : memref<256x512xbf16, #tpu.memory_space<vmem>>, vector<256x512xbf16>
    %cst = arith.constant dense<0.000000e+00> : vector<16x512xf32>
    %3 = tpu.matmul %1, %2, %cst {dimension_numbers = #tpu.dot_dimension_numbers<[1], [0], [0], [1], [0, 0, 1, 1], [], []>} : vector<16x256xbf16>, vector<256x512xbf16>, vector<16x512xf32> -> vector<16x512xf32>
    %c0_3 = arith.constant 0 : index
    %c0_4 = arith.constant 0 : index
    %4 = vector.load %arg4[%c0_3, %c0_4] : memref<1x512xf32, #tpu.memory_space<vmem>>, vector<1x512xf32>
    %5 = vector.broadcast %4 : vector<1x512xf32> to vector<16x512xf32>
    %6 = arith.addf %3, %5 : vector<16x512xf32>
    %cst_5 = arith.constant 0.000000e+00 : f32
    %7 = vector.broadcast %cst_5 : f32 to vector<16x512xf32>
    %8 = arith.cmpf ogt, %6, %7 : vector<16x512xf32>
    %cst_6 = arith.constant 2.000000e-01 : f32
    %9 = vector.broadcast %cst_6 : f32 to vector<16x512xf32>
    %10 = arith.mulf %9, %6 : vector<16x512xf32>
    %11 = arith.select %8, %6, %10 : vector<16x512xi1>, vector<16x512xf32>
    %12 = arith.truncf %11 : vector<16x512xf32> to vector<16x512xbf16>
    %c0_7 = arith.constant 0 : index
    %c0_8 = arith.constant 0 : index
    %13 = vector.load %arg5[%c0_7, %c0_8] : memref<512x512xbf16, #tpu.memory_space<vmem>>, vector<512x512xbf16>
    %cst_9 = arith.constant dense<0.000000e+00> : vector<16x512xf32>
    %14 = tpu.matmul %12, %13, %cst_9 {dimension_numbers = #tpu.dot_dimension_numbers<[1], [0], [0], [1], [0, 0, 1, 1], [], []>} : vector<16x512xbf16>, vector<512x512xbf16>, vector<16x512xf32> -> vector<16x512xf32>
    %c0_10 = arith.constant 0 : index
    %c0_11 = arith.constant 0 : index
    %15 = vector.load %arg6[%c0_10, %c0_11] : memref<1x512xf32, #tpu.memory_space<vmem>>, vector<1x512xf32>
    %16 = vector.broadcast %15 : vector<1x512xf32> to vector<16x512xf32>
    %17 = arith.addf %14, %16 : vector<16x512xf32>
    %cst_12 = arith.constant 0.000000e+00 : f32
    %18 = vector.broadcast %cst_12 : f32 to vector<16x512xf32>
    %19 = arith.cmpf ogt, %17, %18 : vector<16x512xf32>
    %cst_13 = arith.constant 2.000000e-01 : f32
    %20 = vector.broadcast %cst_13 : f32 to vector<16x512xf32>
    %21 = arith.mulf %20, %17 : vector<16x512xf32>
    %22 = arith.select %19, %17, %21 : vector<16x512xi1>, vector<16x512xf32>
    %23 = arith.truncf %22 : vector<16x512xf32> to vector<16x512xbf16>
    %c0_14 = arith.constant 0 : index
    %c0_15 = arith.constant 0 : index
    %24 = vector.load %arg7[%c0_14, %c0_15] : memref<512x512xbf16, #tpu.memory_space<vmem>>, vector<512x512xbf16>
    %cst_16 = arith.constant dense<0.000000e+00> : vector<16x512xf32>
    %25 = tpu.matmul %23, %24, %cst_16 {dimension_numbers = #tpu.dot_dimension_numbers<[1], [0], [0], [1], [0, 0, 1, 1], [], []>} : vector<16x512xbf16>, vector<512x512xbf16>, vector<16x512xf32> -> vector<16x512xf32>
    %c0_17 = arith.constant 0 : index
    %c0_18 = arith.constant 0 : index
    %26 = vector.load %arg8[%c0_17, %c0_18] : memref<1x512xf32, #tpu.memory_space<vmem>>, vector<1x512xf32>
    %27 = vector.broadcast %26 : vector<1x512xf32> to vector<16x512xf32>
    %28 = arith.addf %25, %27 : vector<16x512xf32>
    %cst_19 = arith.constant 0.000000e+00 : f32
    %29 = vector.broadcast %cst_19 : f32 to vector<16x512xf32>
    %30 = arith.cmpf ogt, %28, %29 : vector<16x512xf32>
    %cst_20 = arith.constant 2.000000e-01 : f32
    %31 = vector.broadcast %cst_20 : f32 to vector<16x512xf32>
    %32 = arith.mulf %31, %28 : vector<16x512xf32>
    %33 = arith.select %30, %28, %32 : vector<16x512xi1>, vector<16x512xf32>
    %c0_21 = arith.constant 0 : index
    %c0_22 = arith.constant 0 : index
    %34 = vector.load %arg2[%c0_21, %c0_22] : memref<16x1xi32, #tpu.memory_space<vmem>>, vector<16x1xi32>
    %35 = tpu.iota {dimensions = array<i32: 1>} : vector<16x16xi32>
    %36 = vector.broadcast %34 : vector<16x1xi32> to vector<16x16xi32>
    %37 = arith.cmpi eq, %36, %35 : vector<16x16xi32>
    %38 = arith.extui %37 : vector<16x16xi1> to vector<16x16xi32>
    %39 = arith.sitofp %38 : vector<16x16xi32> to vector<16x16xf32>
    %c0_23 = arith.constant 0 : index
    %c0_24 = arith.constant 0 : index
    %40 = vector.load %arg10[%c0_23, %c0_24] : memref<16x128xf32, #tpu.memory_space<vmem>>, vector<16x128xf32>
    %cst_25 = arith.constant dense<0.000000e+00> : vector<16x128xf32>
    %41 = tpu.matmul %39, %40, %cst_25 {dimension_numbers = #tpu.dot_dimension_numbers<[1], [0], [0], [1], [0, 0, 1, 1], [], []>} : vector<16x16xf32>, vector<16x128xf32>, vector<16x128xf32> -> vector<16x128xf32>
    %42 = arith.truncf %33 : vector<16x512xf32> to vector<16x512xbf16>
    %c0_26 = arith.constant 0 : index
    %c0_27 = arith.constant 0 : index
    %43 = vector.load %arg9[%c0_26, %c0_27] : memref<512x128xbf16, #tpu.memory_space<vmem>>, vector<512x128xbf16>
    %cst_28 = arith.constant dense<0.000000e+00> : vector<16x128xf32>
    %44 = tpu.matmul %42, %43, %cst_28 {dimension_numbers = #tpu.dot_dimension_numbers<[1], [0], [0], [1], [0, 0, 1, 1], [], []>} : vector<16x512xbf16>, vector<512x128xbf16>, vector<16x128xf32> -> vector<16x128xf32>
    %45 = arith.addf %44, %41 : vector<16x128xf32>
    %46 = tpu.iota {dimensions = array<i32: 1>} : vector<16x128xi32>
    %47 = arith.negf %45 : vector<16x128xf32>
    %48 = math.exp %47 : vector<16x128xf32>
    %cst_29 = arith.constant 1.000000e+00 : f32
    %49 = vector.broadcast %cst_29 : f32 to vector<16x128xf32>
    %50 = arith.addf %49, %48 : vector<16x128xf32>
    %51 = arith.divf %49, %50 : vector<16x128xf32>
    %c1_i32 = arith.constant 1 : i32
    %52 = vector.broadcast %c1_i32 : i32 to vector<16x128xi32>
    %53 = arith.cmpi sge, %46, %52 : vector<16x128xi32>
    %c11_i32 = arith.constant 11 : i32
    %54 = vector.broadcast %c11_i32 : i32 to vector<16x128xi32>
    %55 = arith.cmpi slt, %46, %54 : vector<16x128xi32>
    %56 = arith.andi %53, %55 : vector<16x128xi1>
    %cst_30 = arith.constant -1.000000e+30 : f32
    %57 = vector.broadcast %cst_30 : f32 to vector<16x128xf32>
    %58 = arith.select %56, %45, %57 : vector<16x128xi1>, vector<16x128xf32>
    %cst_31 = arith.constant dense<0xFF800000> : vector<16xf32>
    %59 = vector.multi_reduction <maximumf>, %58, %cst_31 [1] : vector<16x128xf32> to vector<16xf32>
    %60 = vector.shape_cast %59 : vector<16xf32> to vector<16x1xf32>
    %61 = vector.broadcast %60 : vector<16x1xf32> to vector<16x128xf32>
    %62 = arith.subf %58, %61 : vector<16x128xf32>
    %63 = math.exp %62 : vector<16x128xf32>
    %cst_32 = arith.constant dense<0.000000e+00> : vector<16xf32>
    %64 = vector.multi_reduction <add>, %63, %cst_32 [1] : vector<16x128xf32> to vector<16xf32>
    %65 = vector.shape_cast %64 : vector<16xf32> to vector<16x1xf32>
    %66 = vector.broadcast %65 : vector<16x1xf32> to vector<16x128xf32>
    %67 = arith.divf %63, %66 : vector<16x128xf32>
    %c0_i32 = arith.constant 0 : i32
    %68 = vector.broadcast %c0_i32 : i32 to vector<16x128xi32>
    %69 = arith.cmpi eq, %46, %68 : vector<16x128xi32>
    %70 = arith.select %69, %51, %67 : vector<16x128xi1>, vector<16x128xf32>
    %71 = arith.truncf %70 : vector<16x128xf32> to vector<16x128xbf16>
    %c0_33 = arith.constant 0 : index
    %c0_34 = arith.constant 0 : index
    %72 = vector.load %arg11[%c0_33, %c0_34] : memref<16x128xbf16, #tpu.memory_space<vmem>>, vector<16x128xbf16>
    tpu.vector_store %arg11[%c0_33, %c0_34], %71 {strides = array<i32>} : memref<16x128xbf16, #tpu.memory_space<vmem>>, vector<16x128xbf16>,
    return
  }
  func.func @transform_0(%arg0: i32) -> (i32, i32) {
    %c0_i32 = arith.constant 0 : i32
    %c0_i32_0 = arith.constant 0 : i32
    return %arg0, %c0_i32 : i32, i32
  }
  func.func @transform_1(%arg0: i32) -> (i32, i32) {
    %c0_i32 = arith.constant 0 : i32
    %c0_i32_0 = arith.constant 0 : i32
    return %arg0, %c0_i32 : i32, i32
  }
  func.func @transform_2(%arg0: i32) -> (i32, i32) {
    %c0_i32 = arith.constant 0 : i32
    %c0_i32_0 = arith.constant 0 : i32
    %c0_i32_1 = arith.constant 0 : i32
    return %c0_i32, %c0_i32_0 : i32, i32
  }
  func.func @transform_3(%arg0: i32) -> (i32, i32) {
    %c0_i32 = arith.constant 0 : i32
    %c0_i32_0 = arith.constant 0 : i32
    %c0_i32_1 = arith.constant 0 : i32
    return %c0_i32, %c0_i32_0 : i32, i32
  }
  func.func @transform_4(%arg0: i32) -> (i32, i32) {
    %c0_i32 = arith.constant 0 : i32
    %c0_i32_0 = arith.constant 0 : i32
    %c0_i32_1 = arith.constant 0 : i32
    return %c0_i32, %c0_i32_0 : i32, i32
  }
  func.func @transform_5(%arg0: i32) -> (i32, i32) {
    %c0_i32 = arith.constant 0 : i32
    %c0_i32_0 = arith.constant 0 : i32
    %c0_i32_1 = arith.constant 0 : i32
    return %c0_i32, %c0_i32_0 : i32, i32
  }
  func.func @transform_6(%arg0: i32) -> (i32, i32) {
    %c0_i32 = arith.constant 0 : i32
    %c0_i32_0 = arith.constant 0 : i32
    %c0_i32_1 = arith.constant 0 : i32
    return %c0_i32, %c0_i32_0 : i32, i32
  }
  func.func @transform_7(%arg0: i32) -> (i32, i32) {
    %c0_i32 = arith.constant 0 : i32
    %c0_i32_0 = arith.constant 0 : i32
    %c0_i32_1 = arith.constant 0 : i32
    return %c0_i32, %c0_i32_0 : i32, i32
  }
  func.func @transform_8(%arg0: i32) -> (i32, i32) {
    %c0_i32 = arith.constant 0 : i32
    %c0_i32_0 = arith.constant 0 : i32
    %c0_i32_1 = arith.constant 0 : i32
    return %c0_i32, %c0_i32_0 : i32, i32
  }
  func.func @transform_9(%arg0: i32) -> (i32, i32) {
    %c0_i32 = arith.constant 0 : i32
    %c0_i32_0 = arith.constant 0 : i32
    %c0_i32_1 = arith.constant 0 : i32
    return %c0_i32, %c0_i32_0 : i32, i32
  }
  func.func @transform_10(%arg0: i32) -> (i32, i32) {
    %c0_i32 = arith.constant 0 : i32
    %c0_i32_0 = arith.constant 0 : i32
    return %arg0, %c0_i32 : i32, i32
  }
}

</mosaic_0001>

<llo_original>
// kernel: tpu_custom_call.1
$region0: #{tpu_custom_call.1}
  #allocation0 [shape = 'u32[]', space=smem, size = 0x4, offset = 0x4, fixed_abs, tag = 'smem constant byte address 0x4 - core index']
  #allocation1 [shape = 'u32[144,128]{1,0:T(1,128)}', space=vmem, size = 0x12000, scoped, tag = 'internal scratch']
  %s0 = inlined_call_operand.hbm [shape: f32[16,256], index: 0, kind: input, shape index: {}]
  %s1 = inlined_call_operand.vmem [shape: s32[16,1], index: 1, kind: input, shape index: {}]
  %s2 = inlined_call_operand.hbm [shape: bf16[256,512], index: 2, kind: input, shape index: {}]
  %s3 = inlined_call_operand.vmem [shape: f32[1,512], index: 3, kind: input, shape index: {}]
  %s4 = inlined_call_operand.hbm [shape: bf16[512,512], index: 4, kind: input, shape index: {}]
  %s5 = inlined_call_operand.vmem [shape: f32[1,512], index: 5, kind: input, shape index: {}]
  %s6 = inlined_call_operand.hbm [shape: bf16[512,512], index: 6, kind: input, shape index: {}]
  %s7 = inlined_call_operand.vmem [shape: f32[1,512], index: 7, kind: input, shape index: {}]
  %s8 = inlined_call_operand.hbm [shape: bf16[512,128], index: 8, kind: input, shape index: {}]
  %s9 = inlined_call_operand.vmem [shape: f32[16,128], index: 9, kind: input, shape index: {}]
  %s10 = inlined_call_operand.hbm [shape: bf16[16,128], index: 10, kind: output, shape index: {}]
  %s11 = sld [smem:[#allocation0]]
  $region70: #{tpu_custom_call.1} parent=0
    _
  %s13 = ssub.s32 1, %s11
  %s14 = scalar_select 0, %s13, %s11
  $region1: #{tpu_custom_call.1} parent=0
    #allocation2 [shape = 'u8[16384]{0}', space=vmem, size = 0x4000, scoped, tag = 'input window, operand 0, single buffered']
    #allocation3 [shape = 's32[1]{0}', space=sflag, size = 0x4, scoped, tag = 'scoped memory for tpu_custom_call.1']
    #allocation4 [shape = 's32[1]{0}', space=sflag, size = 0x4, scoped, tag = 'scoped memory for tpu_custom_call.1']
    #allocation5 [shape = 'u8[262144]{0}', space=vmem, size = 0x40000, scoped, tag = 'input window, operand 2, single buffered']
    #allocation6 [shape = 's32[1]{0}', space=sflag, size = 0x4, scoped, tag = 'scoped memory for tpu_custom_call.1']
    #allocation7 [shape = 'u8[524288]{0}', space=vmem, size = 0x80000, scoped, tag = 'input window, operand 4, single buffered']
    #allocation8 [shape = 'u8[524288]{0}', space=vmem, size = 0x80000, scoped, tag = 'input window, operand 6, single buffered']
    #allocation9 [shape = 's32[1]{0}', space=sflag, size = 0x4, scoped, tag = 'scoped memory for tpu_custom_call.1']
    #allocation10 [shape = 'u8[131072]{0}', space=vmem, size = 0x20000, scoped, tag = 'input window, operand 8, single buffered']
    #allocation11 [shape = 'u8[4096]{0}', space=vmem, size = 0x1000, scoped, tag = 'output window, operand 0, single buffered']
    %15 = vsyncpa [#allocation3], 0
    %16 = vsyncpa [#allocation6], 0
    %17 = vsyncpa [#allocation9], 0
    %18 = vsyncpa [#allocation4], 0
    // Predicated region
    $region2: #{tpu_custom_call.1} parent=1 // pred_check
      _
    $region3: #{tpu_custom_call.1} parent=1 // pred_check_branch
      %20 = sbr.rel (0) target = $region5
    $region4: #{tpu_custom_call.1} parent=1 // pred_region
      %s22 = ssub.s32 512, 512
      %23 = vsyncadd [#allocation3], %s22
      %s24 = sshll.u32 [#allocation2], 4
      %s25 = int_to_ptr.vmem [resolvable:$true] %s24
      %30 = dma.hbm_to_vmem [thread:$0]  %s0, 512, %s25, [#allocation3], 256, 256, 16
    $region5: #{tpu_custom_call.1} parent=1 // pred_fallthru
      _
    // Predicated region
    $region6: #{tpu_custom_call.1} parent=1 // pred_check
      _
    $region7: #{tpu_custom_call.1} parent=1 // pred_check_branch
      %32 = sbr.rel (0) target = $region9
    $region8: #{tpu_custom_call.1} parent=1 // pred_region
      _
    $region9: #{tpu_custom_call.1} parent=1 // pred_fallthru
      _
    // Predicated region
    $region10: #{tpu_custom_call.1} parent=1 // pred_check
      _
    $region11: #{tpu_custom_call.1} parent=1 // pred_check_branch
      %34 = sbr.rel (0) target = $region13
    $region12: #{tpu_custom_call.1} parent=1 // pred_region
      %s36 = ssub.s32 8192, 8192
      %37 = vsyncadd [#allocation6], %s36
      %s38 = sshll.u32 [#allocation5], 4
      %s39 = int_to_ptr.vmem [resolvable:$true] %s38
      %44 = dma.hbm_to_vmem [thread:$0]  %s2, 8192, %s39, [#allocation6], 256, 256, 16
    $region13: #{tpu_custom_call.1} parent=1 // pred_fallthru
      _
    // Predicated region
    $region14: #{tpu_custom_call.1} parent=1 // pred_check
      _
    $region15: #{tpu_custom_call.1} parent=1 // pred_check_branch
      %46 = sbr.rel (0) target = $region17
    $region16: #{tpu_custom_call.1} parent=1 // pred_region
      _
    $region17: #{tpu_custom_call.1} parent=1 // pred_fallthru
      _
    // Predicated region
    $region18: #{tpu_custom_call.1} parent=1 // pred_check
      _
    $region19: #{tpu_custom_call.1} parent=1 // pred_check_branch
      %48 = sbr.rel (0) target = $region21
    $region20: #{tpu_custom_call.1} parent=1 // pred_region
      %s50 = ssub.s32 16384, 16384
      %51 = vsyncadd [#allocation6], %s50
      %s52 = sshll.u32 [#allocation7], 4
      %s53 = int_to_ptr.vmem [resolvable:$true] %s52
      %58 = dma.hbm_to_vmem [thread:$0]  %s4, 16384, %s53, [#allocation6], 256, 256, 16
    $region21: #{tpu_custom_call.1} parent=1 // pred_fallthru
      _
    // Predicated region
    $region22: #{tpu_custom_call.1} parent=1 // pred_check
      _
    $region23: #{tpu_custom_call.1} parent=1 // pred_check_branch
      %60 = sbr.rel (0) target = $region25
    $region24: #{tpu_custom_call.1} parent=1 // pred_region
      _
    $region25: #{tpu_custom_call.1} parent=1 // pred_fallthru
      _
    // Predicated region
    $region26: #{tpu_custom_call.1} parent=1 // pred_check
      _
    $region27: #{tpu_custom_call.1} parent=1 // pred_check_branch
      %62 = sbr.rel (0) target = $region29
    $region28: #{tpu_custom_call.1} parent=1 // pred_region
      %s64 = ssub.s32 16384, 16384
      %65 = vsyncadd [#allocation9], %s64
      %s66 = sshll.u32 [#allocation8], 4
      %s67 = int_to_ptr.vmem [resolvable:$true] %s66
      %72 = dma.hbm_to_vmem [thread:$0]  %s6, 16384, %s67, [#allocation9], 256, 256, 16
    $region29: #{tpu_custom_call.1} parent=1 // pred_fallthru
      _
    // Predicated region
    $region30: #{tpu_custom_call.1} parent=1 // pred_check
      _
    $region31: #{tpu_custom_call.1} parent=1 // pred_check_branch
      %74 = sbr.rel (0) target = $region33
    $region32: #{tpu_custom_call.1} parent=1 // pred_region
      _
    $region33: #{tpu_custom_call.1} parent=1 // pred_fallthru
      _
    // Predicated region
    $region34: #{tpu_custom_call.1} parent=1 // pred_check
      _
    $region35: #{tpu_custom_call.1} parent=1 // pred_check_branch
      %76 = sbr.rel (0) target = $region37
    $region36: #{tpu_custom_call.1} parent=1 // pred_region
      %s78 = ssub.s32 4096, 4096
      %79 = vsyncadd [#allocation9], %s78
      %s80 = sshll.u32 [#allocation10], 4
      %s81 = int_to_ptr.vmem [resolvable:$true] %s80
      %86 = dma.hbm_to_vmem [thread:$0]  %s8, 4096, %s81, [#allocation9], 64, 64, 4
    $region37: #{tpu_custom_call.1} parent=1 // pred_fallthru
      _
    // Predicated region
    $region38: #{tpu_custom_call.1} parent=1 // pred_check
      _
    $region39: #{tpu_custom_call.1} parent=1 // pred_check_branch
      %88 = sbr.rel (0) target = $region41
    $region40: #{tpu_custom_call.1} parent=1 // pred_region
      _
    $region41: #{tpu_custom_call.1} parent=1 // pred_fallthru
      _
    // Predicated region
    $region42: #{tpu_custom_call.1} parent=1 // pred_check
      _
    $region43: #{tpu_custom_call.1} parent=1 // pred_check_branch
      %90 = sbr.rel (0) target = $region45
    $region44: #{tpu_custom_call.1} parent=1 // pred_region
      %91 = dma.done [#allocation3], 512
    $region45: #{tpu_custom_call.1} parent=1 // pred_fallthru
      _
    // Predicated region
    $region46: #{tpu_custom_call.1} parent=1 // pred_check
      _
    $region47: #{tpu_custom_call.1} parent=1 // pred_check_branch
      %93 = sbr.rel (0) target = $region49
    $region48: #{tpu_custom_call.1} parent=1 // pred_region
      %94 = dma.done [#allocation6], 8192
    $region49: #{tpu_custom_call.1} parent=1 // pred_fallthru
      _
    // Predicated region
    $region50: #{tpu_custom_call.1} parent=1 // pred_check
      _
    $region51: #{tpu_custom_call.1} parent=1 // pred_check_branch
      %96 = sbr.rel (0) target = $region53
    $region52: #{tpu_custom_call.1} parent=1 // pred_region
      %97 = dma.done [#allocation6], 16384
    $region53: #{tpu_custom_call.1} parent=1 // pred_fallthru
      _
    // Predicated region
    $region54: #{tpu_custom_call.1} parent=1 // pred_check
      _
    $region55: #{tpu_custom_call.1} parent=1 // pred_check_branch
      %99 = sbr.rel (0) target = $region57
    $region56: #{tpu_custom_call.1} parent=1 // pred_region
      %100 = dma.done [#allocation9], 16384
    $region57: #{tpu_custom_call.1} parent=1 // pred_fallthru
      _
    // Predicated region
    $region58: #{tpu_custom_call.1} parent=1 // pred_check
      _
    $region59: #{tpu_custom_call.1} parent=1 // pred_check_branch
      %102 = sbr.rel (0) target = $region61
    $region60: #{tpu_custom_call.1} parent=1 // pred_region
      %103 = dma.done [#allocation9], 4096
    $region61: #{tpu_custom_call.1} parent=1 // pred_fallthru
      _
    %v105 = vld [vmem:[#allocation2] sm:$0xff]
    %v106 = vld [vmem:[#allocation2 + $0x8] sm:$0xff]
    %v107 = vld [vmem:[#allocation2 + $0x10] sm:$0xff]
    %v108 = vld [vmem:[#allocation2 + $0x18] sm:$0xff]
    %v109 = vpack.c.bf16 %v107, %v105
    %v110 = vpack.c.bf16 %v108, %v106
    %v111 = vld [vmem:[#allocation5] sm:$0xff]
    %v112 = vld [vmem:[#allocation5 + $0x8] sm:$0xff]
    %v113 = vld [vmem:[#allocation5 + $0x10] sm:$0xff]
    %v114 = vld [vmem:[#allocation5 + $0x18] sm:$0xff]
    %v115 = vld [vmem:[#allocation5 + $0x20] sm:$0xff]
    %v116 = vld [vmem:[#allocation5 + $0x28] sm:$0xff]
    %v117 = vld [vmem:[#allocation5 + $0x30] sm:$0xff]
    %v118 = vld [vmem:[#allocation5 + $0x38] sm:$0xff]
    %v119 = vld [vmem:[#allocation5 + $0x40] sm:$0xff]
    %v120 = vld [vmem:[#allocation5 + $0x48] sm:$0xff]
    %v121 = vld [vmem:[#allocation5 + $0x50] sm:$0xff]
    %v122 = vld [vmem:[#allocation5 + $0x58] sm:$0xff]
    %v123 = vld [vmem:[#allocation5 + $0x60] sm:$0xff]
    %v124 = vld [vmem:[#allocation5 + $0x68] sm:$0xff]
    %v125 = vld [vmem:[#allocation5 + $0x70] sm:$0xff]
    %v126 = vld [vmem:[#allocation5 + $0x78] sm:$0xff]
    %v127 = vld [vmem:[#allocation5 + $0x80] sm:$0xff]
    %v128 = vld [vmem:[#allocation5 + $0x88] sm:$0xff]
    %v129 = vld [vmem:[#allocation5 + $0x90] sm:$0xff]
    %v130 = vld [vmem:[#allocation5 + $0x98] sm:$0xff]
    %v131 = vld [vmem:[#allocation5 + $0xa0] sm:$0xff]
    %v132 = vld [vmem:[#allocation5 + $0xa8] sm:$0xff]
    %v133 = vld [vmem:[#allocation5 + $0xb0] sm:$0xff]
    %v134 = vld [vmem:[#allocation5 + $0xb8] sm:$0xff]
    %v135 = vld [vmem:[#allocation5 + $0xc0] sm:$0xff]
    %v136 = vld [vmem:[#allocation5 + $0xc8] sm:$0xff]
    %v137 = vld [vmem:[#allocation5 + $0xd0] sm:$0xff]
    %v138 = vld [vmem:[#allocation5 + $0xd8] sm:$0xff]
    %v139 = vld [vmem:[#allocation5 + $0xe0] sm:$0xff]
    %v140 = vld [vmem:[#allocation5 + $0xe8] sm:$0xff]
    %v141 = vld [vmem:[#allocation5 + $0xf0] sm:$0xff]
    %v142 = vld [vmem:[#allocation5 + $0xf8] sm:$0xff]
    %v143 = vld [vmem:[#allocation5 + $0x100] sm:$0xff]
    %v144 = vld [vmem:[#allocation5 + $0x108] sm:$0xff]
    %v145 = vld [vmem:[#allocation5 + $0x110] sm:$0xff]
    %v146 = vld [vmem:[#allocation5 + $0x118] sm:$0xff]
    %v147 = vld [vmem:[#allocation5 + $0x120] sm:$0xff]
    %v148 = vld [vmem:[#allocation5 + $0x128] sm:$0xff]
    %v149 = vld [vmem:[#allocation5 + $0x130] sm:$0xff]
    %v150 = vld [vmem:[#allocation5 + $0x138] sm:$0xff]
    %v151 = vld [vmem:[#allocation5 + $0x140] sm:$0xff]
    %v152 = vld [vmem:[#allocation5 + $0x148] sm:$0xff]
    %v153 = vld [vmem:[#allocation5 + $0x150] sm:$0xff]
    %v154 = vld [vmem:[#allocation5 + $0x158] sm:$0xff]
    %v155 = vld [vmem:[#allocation5 + $0x160] sm:$0xff]
    %v156 = vld [vmem:[#allocation5 + $0x168] sm:$0xff]
    %v157 = vld [vmem:[#allocation5 + $0x170] sm:$0xff]
    %v158 = vld [vmem:[#allocation5 + $0x178] sm:$0xff]
    %v159 = vld [vmem:[#allocation5 + $0x180] sm:$0xff]
    %v160 = vld [vmem:[#allocation5 + $0x188] sm:$0xff]
    %v161 = vld [vmem:[#allocation5 + $0x190] sm:$0xff]
    %v162 = vld [vmem:[#allocation5 + $0x198] sm:$0xff]
    %v163 = vld [vmem:[#allocation5 + $0x1a0] sm:$0xff]
    %v164 = vld [vmem:[#allocation5 + $0x1a8] sm:$0xff]
    %v165 = vld [vmem:[#allocation5 + $0x1b0] sm:$0xff]
    %v166 = vld [vmem:[#allocation5 + $0x1b8] sm:$0xff]
    %v167 = vld [vmem:[#allocation5 + $0x1c0] sm:$0xff]
    %v168 = vld [vmem:[#allocation5 + $0x1c8] sm:$0xff]
    %v169 = vld [vmem:[#allocation5 + $0x1d0] sm:$0xff]
    %v170 = vld [vmem:[#allocation5 + $0x1d8] sm:$0xff]
    %v171 = vld [vmem:[#allocation5 + $0x1e0] sm:$0xff]
    %v172 = vld [vmem:[#allocation5 + $0x1e8] sm:$0xff]
    %v173 = vld [vmem:[#allocation5 + $0x1f0] sm:$0xff]
    %v174 = vld [vmem:[#allocation5 + $0x1f8] sm:$0xff]
    %v175 = vld [vmem:[%s3] sm:$0xf]
    %v177 = vlaneseq
    %v178 = vshrl.u32 %v177, 7
    %v179 = vsub.s32 0, %v178
    %v180 = vrot.slane %v175, %v179
    %v181 = vlaneseq
    %v182 = vshrl.u32 %v181, 7
    %v183 = vsub.s32 1, %v182
    %v184 = vrot.slane %v175, %v183
    %v185 = vlaneseq
    %v186 = vshrl.u32 %v185, 7
    %v187 = vsub.s32 2, %v186
    %v188 = vrot.slane %v175, %v187
    %v189 = vlaneseq
    %v190 = vshrl.u32 %v189, 7
    %v191 = vsub.s32 3, %v190
    %v192 = vrot.slane %v175, %v191
    %v261 = vunpack.c.l.b16 %v111
    %v262 = vunpack.c.h.b16 %v111
    %v263 = vunpack.c.l.b16 %v112
    %v264 = vunpack.c.h.b16 %v112
    %v265 = vunpack.c.l.b16 %v113
    %v266 = vunpack.c.h.b16 %v113
    %v267 = vunpack.c.l.b16 %v114
    %v268 = vunpack.c.h.b16 %v114
    %v269 = vunpack.c.l.b16 %v115
    %v270 = vunpack.c.h.b16 %v115
    %v271 = vunpack.c.l.b16 %v116
    %v272 = vunpack.c.h.b16 %v116
    %v273 = vunpack.c.l.b16 %v117
    %v274 = vunpack.c.h.b16 %v117
    %v275 = vunpack.c.l.b16 %v118
    %v276 = vunpack.c.h.b16 %v118
    %v277 = vunpack.c.l.b16 %v119
    %v278 = vunpack.c.h.b16 %v119
    %v279 = vunpack.c.l.b16 %v120
    %v280 = vunpack.c.h.b16 %v120
    %v281 = vunpack.c.l.b16 %v121
    %v282 = vunpack.c.h.b16 %v121
    %v283 = vunpack.c.l.b16 %v122
    %v284 = vunpack.c.h.b16 %v122
    %v285 = vunpack.c.l.b16 %v123
    %v286 = vunpack.c.h.b16 %v123
    %v287 = vunpack.c.l.b16 %v124
    %v288 = vunpack.c.h.b16 %v124
    %v289 = vunpack.c.l.b16 %v125
    %v290 = vunpack.c.h.b16 %v125
    %v291 = vunpack.c.l.b16 %v126
    %v292 = vunpack.c.h.b16 %v126
    %v293 = vunpack.c.l.b16 %v127
    %v294 = vunpack.c.h.b16 %v127
    %v295 = vunpack.c.l.b16 %v128
    %v296 = vunpack.c.h.b16 %v128
    %v297 = vunpack.c.l.b16 %v129
    %v298 = vunpack.c.h.b16 %v129
    %v299 = vunpack.c.l.b16 %v130
    %v300 = vunpack.c.h.b16 %v130
    %v301 = vunpack.c.l.b16 %v131
    %v302 = vunpack.c.h.b16 %v131
    %v303 = vunpack.c.l.b16 %v132
    %v304 = vunpack.c.h.b16 %v132
    %v305 = vunpack.c.l.b16 %v133
    %v306 = vunpack.c.h.b16 %v133
    %v307 = vunpack.c.l.b16 %v134
    %v308 = vunpack.c.h.b16 %v134
    %v309 = vunpack.c.l.b16 %v135
    %v310 = vunpack.c.h.b16 %v135
    %v311 = vunpack.c.l.b16 %v136
    %v312 = vunpack.c.h.b16 %v136
    %v313 = vunpack.c.l.b16 %v137
    %v314 = vunpack.c.h.b16 %v137
    %v315 = vunpack.c.l.b16 %v138
    %v316 = vunpack.c.h.b16 %v138
    %v317 = vunpack.c.l.b16 %v139
    %v318 = vunpack.c.h.b16 %v139
    %v319 = vunpack.c.l.b16 %v140
    %v320 = vunpack.c.h.b16 %v140
    %v321 = vunpack.c.l.b16 %v141
    %v322 = vunpack.c.h.b16 %v141
    %v323 = vunpack.c.l.b16 %v142
    %v324 = vunpack.c.h.b16 %v142
    %v325 = vunpack.c.l.b16 %v143
    %v326 = vunpack.c.h.b16 %v143
    %v327 = vunpack.c.l.b16 %v144
    %v328 = vunpack.c.h.b16 %v144
    %v329 = vunpack.c.l.b16 %v145
    %v330 = vunpack.c.h.b16 %v145
    %v331 = vunpack.c.l.b16 %v146
    %v332 = vunpack.c.h.b16 %v146
    %v333 = vunpack.c.l.b16 %v147
    %v334 = vunpack.c.h.b16 %v147
    %v335 = vunpack.c.l.b16 %v148
    %v336 = vunpack.c.h.b16 %v148
    %v337 = vunpack.c.l.b16 %v149
    %v338 = vunpack.c.h.b16 %v149
    %v339 = vunpack.c.l.b16 %v150
    %v340 = vunpack.c.h.b16 %v150
    %v341 = vunpack.c.l.b16 %v151
    %v342 = vunpack.c.h.b16 %v151
    %v343 = vunpack.c.l.b16 %v152
    %v344 = vunpack.c.h.b16 %v152
    %v345 = vunpack.c.l.b16 %v153
    %v346 = vunpack.c.h.b16 %v153
    %v347 = vunpack.c.l.b16 %v154
    %v348 = vunpack.c.h.b16 %v154
    %v349 = vunpack.c.l.b16 %v155
    %v350 = vunpack.c.h.b16 %v155
    %v351 = vunpack.c.l.b16 %v156
    %v352 = vunpack.c.h.b16 %v156
    %v353 = vunpack.c.l.b16 %v157
    %v354 = vunpack.c.h.b16 %v157
    %v355 = vunpack.c.l.b16 %v158
    %v356 = vunpack.c.h.b16 %v158
    %v357 = vunpack.c.l.b16 %v159
    %v358 = vunpack.c.h.b16 %v159
    %v359 = vunpack.c.l.b16 %v160
    %v360 = vunpack.c.h.b16 %v160
    %v361 = vunpack.c.l.b16 %v161
    %v362 = vunpack.c.h.b16 %v161
    %v363 = vunpack.c.l.b16 %v162
    %v364 = vunpack.c.h.b16 %v162
    %v365 = vunpack.c.l.b16 %v163
    %v366 = vunpack.c.h.b16 %v163
    %v367 = vunpack.c.l.b16 %v164
    %v368 = vunpack.c.h.b16 %v164
    %v369 = vunpack.c.l.b16 %v165
    %v370 = vunpack.c.h.b16 %v165
    %v371 = vunpack.c.l.b16 %v166
    %v372 = vunpack.c.h.b16 %v166
    %v373 = vunpack.c.l.b16 %v167
    %v374 = vunpack.c.h.b16 %v167
    %v375 = vunpack.c.l.b16 %v168
    %v376 = vunpack.c.h.b16 %v168
    %v377 = vunpack.c.l.b16 %v169
    %v378 = vunpack.c.h.b16 %v169
    %v379 = vunpack.c.l.b16 %v170
    %v380 = vunpack.c.h.b16 %v170
    %v381 = vunpack.c.l.b16 %v171
    %v382 = vunpack.c.h.b16 %v171
    %v383 = vunpack.c.l.b16 %v172
    %v384 = vunpack.c.h.b16 %v172
    %v385 = vunpack.c.l.b16 %v173
    %v386 = vunpack.c.h.b16 %v173
    %v387 = vunpack.c.l.b16 %v174
    %v388 = vunpack.c.h.b16 %v174
    %v389 = vpack.c.b16 %v265, %v261
    %v390 = vpack.c.b16 %v266, %v262
    %v391 = vpack.c.b16 %v267, %v263
    %v392 = vpack.c.b16 %v268, %v264
    %v393 = vpack.c.b16 %v273, %v269
    %v394 = vpack.c.b16 %v274, %v270
    %v395 = vpack.c.b16 %v275, %v271
    %v396 = vpack.c.b16 %v276, %v272
    %v397 = vpack.c.b16 %v281, %v277
    %v398 = vpack.c.b16 %v282, %v278
    %v399 = vpack.c.b16 %v283, %v279
    %v400 = vpack.c.b16 %v284, %v280
    %v401 = vpack.c.b16 %v289, %v285
    %v402 = vpack.c.b16 %v290, %v286
    %v403 = vpack.c.b16 %v291, %v287
    %v404 = vpack.c.b16 %v292, %v288
    %v405 = vpack.c.b16 %v297, %v293
    %v406 = vpack.c.b16 %v298, %v294
    %v407 = vpack.c.b16 %v299, %v295
    %v408 = vpack.c.b16 %v300, %v296
    %v409 = vpack.c.b16 %v305, %v301
    %v410 = vpack.c.b16 %v306, %v302
    %v411 = vpack.c.b16 %v307, %v303
    %v412 = vpack.c.b16 %v308, %v304
    %v413 = vpack.c.b16 %v313, %v309
    %v414 = vpack.c.b16 %v314, %v310
    %v415 = vpack.c.b16 %v315, %v311
    %v416 = vpack.c.b16 %v316, %v312
    %v417 = vpack.c.b16 %v321, %v317
    %v418 = vpack.c.b16 %v322, %v318
    %v419 = vpack.c.b16 %v323, %v319
    %v420 = vpack.c.b16 %v324, %v320
    %v421 = vpack.c.b16 %v329, %v325
    %v422 = vpack.c.b16 %v330, %v326
    %v423 = vpack.c.b16 %v331, %v327
    %v424 = vpack.c.b16 %v332, %v328
    %v425 = vpack.c.b16 %v337, %v333
    %v426 = vpack.c.b16 %v338, %v334
    %v427 = vpack.c.b16 %v339, %v335
    %v428 = vpack.c.b16 %v340, %v336
    %v429 = vpack.c.b16 %v345, %v341
    %v430 = vpack.c.b16 %v346, %v342
    %v431 = vpack.c.b16 %v347, %v343
    %v432 = vpack.c.b16 %v348, %v344
    %v433 = vpack.c.b16 %v353, %v349
    %v434 = vpack.c.b16 %v354, %v350
    %v435 = vpack.c.b16 %v355, %v351
    %v436 = vpack.c.b16 %v356, %v352
    %v437 = vpack.c.b16 %v361, %v357
    %v438 = vpack.c.b16 %v362, %v358
    %v439 = vpack.c.b16 %v363, %v359
    %v440 = vpack.c.b16 %v364, %v360
    %v441 = vpack.c.b16 %v369, %v365
    %v442 = vpack.c.b16 %v370, %v366
    %v443 = vpack.c.b16 %v371, %v367
    %v444 = vpack.c.b16 %v372, %v368
    %v445 = vpack.c.b16 %v377, %v373
    %v446 = vpack.c.b16 %v378, %v374
    %v447 = vpack.c.b16 %v379, %v375
    %v448 = vpack.c.b16 %v380, %v376
    %v449 = vpack.c.b16 %v385, %v381
    %v450 = vpack.c.b16 %v386, %v382
    %v451 = vpack.c.b16 %v387, %v383
    %v452 = vpack.c.b16 %v388, %v384
    %517 = vmatprep.subr.bf16.mxu0 %v390
    %518 = vmatpush1.bf16.msra.mxu0 %v389
    %519 = vmatprep.subr.bf16.mxu0 %v394
    %520 = vmatpush1.bf16.msra.mxu0 %v393
    %521 = vmatprep.subr.bf16.mxu0 %v398
    %522 = vmatpush1.bf16.msra.mxu0 %v397
    %523 = vmatprep.subr.bf16.mxu0 %v402
    %524 = vmatpush1.bf16.msra.mxu0 %v401
    %525 = vmatprep.subr.bf16.mxu0 %v406
    %526 = vmatpush1.bf16.msra.mxu0 %v405
    %527 = vmatprep.subr.bf16.mxu0 %v410
    %528 = vmatpush1.bf16.msra.mxu0 %v409
    %529 = vmatprep.subr.bf16.mxu0 %v414
    %530 = vmatpush1.bf16.msra.mxu0 %v413
    %531 = vmatprep.subr.bf16.mxu0 %v418
    %532 = vmatpush1.bf16.msra.mxu0 %v417
    %533 = vmatprep.subr.bf16.mxu0 %v422
    %534 = vmatpush1.bf16.msra.mxu0 %v421
    %535 = vmatprep.subr.bf16.mxu0 %v426
    %536 = vmatpush1.bf16.msra.mxu0 %v425
    %537 = vmatprep.subr.bf16.mxu0 %v430
    %538 = vmatpush1.bf16.msra.mxu0 %v429
    %539 = vmatprep.subr.bf16.mxu0 %v434
    %540 = vmatpush1.bf16.msra.mxu0 %v433
    %541 = vmatprep.subr.bf16.mxu0 %v438
    %542 = vmatpush1.bf16.msra.mxu0 %v437
    %543 = vmatprep.subr.bf16.mxu0 %v442
    %544 = vmatpush1.bf16.msra.mxu0 %v441
    %545 = vmatprep.subr.bf16.mxu0 %v446
    %546 = vmatpush1.bf16.msra.mxu0 %v445
    %547 = vmatprep.subr.bf16.mxu0 %v450
    %548 = vmatpush1.bf16.msra.mxu0 %v449
    %549 = vmatprep.mubr.bf16.mxu0 %v110
    %550 = vmatmul.mubr.bf16.gmra.mrb[0].mxu0 %v109
    %v551 = vpop.f32.mrb[0].mxu0
    %v552 = vadd.f32 %v180, %v551
    %v553 = vpop.f32.mrb[0].mxu0
    %v554 = vadd.f32 %v184, %v553
    %v555 = vpop.f32.mrb[0].mxu0
    %v556 = vadd.f32 %v180, %v555
    %v557 = vpop.f32.mrb[0].mxu0
    %v558 = vadd.f32 %v184, %v557
    %559 = vdwg.mxu0
    %560 = vmatprep.subr.bf16.mxu0 %v392
    %561 = vmatpush1.bf16.msra.mxu0 %v391
    %562 = vmatprep.subr.bf16.mxu0 %v396
    %563 = vmatpush1.bf16.msra.mxu0 %v395
    %564 = vmatprep.subr.bf16.mxu0 %v400
    %565 = vmatpush1.bf16.msra.mxu0 %v399
    %566 = vmatprep.subr.bf16.mxu0 %v404
    %567 = vmatpush1.bf16.msra.mxu0 %v403
    %568 = vmatprep.subr.bf16.mxu0 %v408
    %569 = vmatpush1.bf16.msra.mxu0 %v407
    %570 = vmatprep.subr.bf16.mxu0 %v412
    %571 = vmatpush1.bf16.msra.mxu0 %v411
    %572 = vmatprep.subr.bf16.mxu0 %v416
    %573 = vmatpush1.bf16.msra.mxu0 %v415
    %574 = vmatprep.subr.bf16.mxu0 %v420
    %575 = vmatpush1.bf16.msra.mxu0 %v419
    %576 = vmatprep.subr.bf16.mxu0 %v424
    %577 = vmatpush1.bf16.msra.mxu0 %v423
    %578 = vmatprep.subr.bf16.mxu0 %v428
    %579 = vmatpush1.bf16.msra.mxu0 %v427
    %580 = vmatprep.subr.bf16.mxu0 %v432
    %581 = vmatpush1.bf16.msra.mxu0 %v431
    %582 = vmatprep.subr.bf16.mxu0 %v436
    %583 = vmatpush1.bf16.msra.mxu0 %v435
    %584 = vmatprep.subr.bf16.mxu0 %v440
    %585 = vmatpush1.bf16.msra.mxu0 %v439
    %586 = vmatprep.subr.bf16.mxu0 %v444
    %587 = vmatpush1.bf16.msra.mxu0 %v443
    %588 = vmatprep.subr.bf16.mxu0 %v448
    %589 = vmatpush1.bf16.msra.mxu0 %v447
    %590 = vmatprep.subr.bf16.mxu0 %v452
    %591 = vmatpush1.bf16.msra.mxu0 %v451
    %592 = vmatprep.mubr.bf16.mxu0 %v110
    %593 = vmatmul.mubr.bf16.gmra.mrb[0].mxu0 %v109
    %v594 = vpop.f32.mrb[0].mxu0
    %v595 = vadd.f32 %v188, %v594
    %v596 = vpop.f32.mrb[0].mxu0
    %v597 = vadd.f32 %v192, %v596
    %v598 = vpop.f32.mrb[0].mxu0
    %v599 = vadd.f32 %v188, %v598
    %v600 = vpop.f32.mrb[0].mxu0
    %v601 = vadd.f32 %v192, %v600
    %602 = vdwg.mxu0
    %vm603 = vcmp.gt.f32.partialorder %v552, 0.0
    %vm604 = vcmp.gt.f32.partialorder %v554, 0.0
    %vm605 = vcmp.gt.f32.partialorder %v595, 0.0
    %vm606 = vcmp.gt.f32.partialorder %v597, 0.0
    %vm607 = vcmp.gt.f32.partialorder %v556, 0.0
    %vm608 = vcmp.gt.f32.partialorder %v558, 0.0
    %vm609 = vcmp.gt.f32.partialorder %v599, 0.0
    %vm610 = vcmp.gt.f32.partialorder %v601, 0.0
    %v611 = vmul.f32 %v552, 0.2
    %v612 = vmul.f32 %v554, 0.2
    %v613 = vmul.f32 %v595, 0.2
    %v614 = vmul.f32 %v597, 0.2
    %v615 = vmul.f32 %v556, 0.2
    %v616 = vmul.f32 %v558, 0.2
    %v617 = vmul.f32 %v599, 0.2
    %v618 = vmul.f32 %v601, 0.2
    %v619 = vsel %vm603, %v552, %v611
    %v620 = vsel %vm604, %v554, %v612
    %v621 = vsel %vm605, %v595, %v613
    %v622 = vsel %vm606, %v597, %v614
    %v623 = vsel %vm607, %v556, %v615
    %v624 = vsel %vm608, %v558, %v616
    %v625 = vsel %vm609, %v599, %v617
    %v626 = vsel %vm610, %v601, %v618
    %v627 = vpack.c.bf16 %v623, %v619
    %v628 = vpack.c.bf16 %v624, %v620
    %v629 = vpack.c.bf16 %v625, %v621
    %v630 = vpack.c.bf16 %v626, %v622
    %v631 = vld [vmem:[#allocation7] sm:$0xff]
    %v632 = vld [vmem:[#allocation7 + $0x8] sm:$0xff]
    %v633 = vld [vmem:[#allocation7 + $0x10] sm:$0xff]
    %v634 = vld [vmem:[#allocation7 + $0x18] sm:$0xff]
    %v635 = vld [vmem:[#allocation7 + $0x20] sm:$0xff]
    %v636 = vld [vmem:[#allocation7 + $0x28] sm:$0xff]
    %v637 = vld [vmem:[#allocation7 + $0x30] sm:$0xff]
    %v638 = vld [vmem:[#allocation7 + $0x38] sm:$0xff]
    %v639 = vld [vmem:[#allocation7 + $0x40] sm:$0xff]
    %v640 = vld [vmem:[#allocation7 + $0x48] sm:$0xff]
    %v641 = vld [vmem:[#allocation7 + $0x50] sm:$0xff]
    %v642 = vld [vmem:[#allocation7 + $0x58] sm:$0xff]
    %v643 = vld [vmem:[#allocation7 + $0x60] sm:$0xff]
    %v644 = vld [vmem:[#allocation7 + $0x68] sm:$0xff]
    %v645 = vld [vmem:[#allocation7 + $0x70] sm:$0xff]
    %v646 = vld [vmem:[#allocation7 + $0x78] sm:$0xff]
    %v647 = vld [vmem:[#allocation7 + $0x80] sm:$0xff]
    %v648 = vld [vmem:[#allocation7 + $0x88] sm:$0xff]
    %v649 = vld [vmem:[#allocation7 + $0x90] sm:$0xff]
    %v650 = vld [vmem:[#allocation7 + $0x98] sm:$0xff]
    %v651 = vld [vmem:[#allocation7 + $0xa0] sm:$0xff]
    %v652 = vld [vmem:[#allocation7 + $0xa8] sm:$0xff]
    %v653 = vld [vmem:[#allocation7 + $0xb0] sm:$0xff]
    %v654 = vld [vmem:[#allocation7 + $0xb8] sm:$0xff]
    %v655 = vld [vmem:[#allocation7 + $0xc0] sm:$0xff]
    %v656 = vld [vmem:[#allocation7 + $0xc8] sm:$0xff]
    %v657 = vld [vmem:[#allocation7 + $0xd0] sm:$0xff]
    %v658 = vld [vmem:[#allocation7 + $0xd8] sm:$0xff]
    %v659 = vld [vmem:[#allocation7 + $0xe0] sm:$0xff]
    %v660 = vld [vmem:[#allocation7 + $0xe8] sm:$0xff]
    %v661 = vld [vmem:[#allocation7 + $0xf0] sm:$0xff]
    %v662 = vld [vmem:[#allocation7 + $0xf8] sm:$0xff]
    %v663 = vld [vmem:[#allocation7 + $0x100] sm:$0xff]
    %v664 = vld [vmem:[#allocation7 + $0x108] sm:$0xff]
    %v665 = vld [vmem:[#allocation7 + $0x110] sm:$0xff]
    %v666 = vld [vmem:[#allocation7 + $0x118] sm:$0xff]
    %v667 = vld [vmem:[#allocation7 + $0x120] sm:$0xff]
    %v668 = vld [vmem:[#allocation7 + $0x128] sm:$0xff]
    %v669 = vld [vmem:[#allocation7 + $0x130] sm:$0xff]
    %v670 = vld [vmem:[#allocation7 + $0x138] sm:$0xff]
    %v671 = vld [vmem:[#allocation7 + $0x140] sm:$0xff]
    %v672 = vld [vmem:[#allocation7 + $0x148] sm:$0xff]
    %v673 = vld [vmem:[#allocation7 + $0x150] sm:$0xff]
    %v674 = vld [vmem:[#allocation7 + $0x158] sm:$0xff]
    %v675 = vld [vmem:[#allocation7 + $0x160] sm:$0xff]
    %v676 = vld [vmem:[#allocation7 + $0x168] sm:$0xff]
    %v677 = vld [vmem:[#allocation7 + $0x170] sm:$0xff]
    %v678 = vld [vmem:[#allocation7 + $0x178] sm:$0xff]
    %v679 = vld [vmem:[#allocation7 + $0x180] sm:$0xff]
    %v680 = vld [vmem:[#allocation7 + $0x188] sm:$0xff]
    %v681 = vld [vmem:[#allocation7 + $0x190] sm:$0xff]
    %v682 = vld [vmem:[#allocation7 + $0x198] sm:$0xff]
    %v683 = vld [vmem:[#allocation7 + $0x1a0] sm:$0xff]
    %v684 = vld [vmem:[#allocation7 + $0x1a8] sm:$0xff]
    %v685 = vld [vmem:[#allocation7 + $0x1b0] sm:$0xff]
    %v686 = vld [vmem:[#allocation7 + $0x1b8] sm:$0xff]
    %v687 = vld [vmem:[#allocation7 + $0x1c0] sm:$0xff]
    %v688 = vld [vmem:[#allocation7 + $0x1c8] sm:$0xff]
    %v689 = vld [vmem:[#allocation7 + $0x1d0] sm:$0xff]
    %v690 = vld [vmem:[#allocation7 + $0x1d8] sm:$0xff]
    %v691 = vld [vmem:[#allocation7 + $0x1e0] sm:$0xff]
    %v692 = vld [vmem:[#allocation7 + $0x1e8] sm:$0xff]
    %v693 = vld [vmem:[#allocation7 + $0x1f0] sm:$0xff]
    %v694 = vld [vmem:[#allocation7 + $0x1f8] sm:$0xff]
    %v695 = vld [vmem:[#allocation7 + $0x200] sm:$0xff]
    %v696 = vld [vmem:[#allocation7 + $0x208] sm:$0xff]
    %v697 = vld [vmem:[#allocation7 + $0x210] sm:$0xff]
    %v698 = vld [vmem:[#allocation7 + $0x218] sm:$0xff]
    %v699 = vld [vmem:[#allocation7 + $0x220] sm:$0xff]
    %v700 = vld [vmem:[#allocation7 + $0x228] sm:$0xff]
    %v701 = vld [vmem:[#allocation7 + $0x230] sm:$0xff]
    %v702 = vld [vmem:[#allocation7 + $0x238] sm:$0xff]
    %v703 = vld [vmem:[#allocation7 + $0x240] sm:$0xff]
    %v704 = vld [vmem:[#allocation7 + $0x248] sm:$0xff]
    %v705 = vld [vmem:[#allocation7 + $0x250] sm:$0xff]
    %v706 = vld [vmem:[#allocation7 + $0x258] sm:$0xff]
    %v707 = vld [vmem:[#allocation7 + $0x260] sm:$0xff]
    %v708 = vld [vmem:[#allocation7 + $0x268] sm:$0xff]
    %v709 = vld [vmem:[#allocation7 + $0x270] sm:$0xff]
    %v710 = vld [vmem:[#allocation7 + $0x278] sm:$0xff]
    %v711 = vld [vmem:[#allocation7 + $0x280] sm:$0xff]
    %v712 = vld [vmem:[#allocation7 + $0x288] sm:$0xff]
    %v713 = vld [vmem:[#allocation7 + $0x290] sm:$0xff]
    %v714 = vld [vmem:[#allocation7 + $0x298] sm:$0xff]
    %v715 = vld [vmem:[#allocation7 + $0x2a0] sm:$0xff]
    %v716 = vld [vmem:[#allocation7 + $0x2a8] sm:$0xff]
    %v717 = vld [vmem:[#allocation7 + $0x2b0] sm:$0xff]
    %v718 = vld [vmem:[#allocation7 + $0x2b8] sm:$0xff]
    %v719 = vld [vmem:[#allocation7 + $0x2c0] sm:$0xff]
    %v720 = vld [vmem:[#allocation7 + $0x2c8] sm:$0xff]
    %v721 = vld [vmem:[#allocation7 + $0x2d0] sm:$0xff]
    %v722 = vld [vmem:[#allocation7 + $0x2d8] sm:$0xff]
    %v723 = vld [vmem:[#allocation7 + $0x2e0] sm:$0xff]
    %v724 = vld [vmem:[#allocation7 + $0x2e8] sm:$0xff]
    %v725 = vld [vmem:[#allocation7 + $0x2f0] sm:$0xff]
    %v726 = vld [vmem:[#allocation7 + $0x2f8] sm:$0xff]
    %v727 = vld [vmem:[#allocation7 + $0x300] sm:$0xff]
    %v728 = vld [vmem:[#allocation7 + $0x308] sm:$0xff]
    %v729 = vld [vmem:[#allocation7 + $0x310] sm:$0xff]
    %v730 = vld [vmem:[#allocation7 + $0x318] sm:$0xff]
    %v731 = vld [vmem:[#allocation7 + $0x320] sm:$0xff]
    %v732 = vld [vmem:[#allocation7 + $0x328] sm:$0xff]
    %v733 = vld [vmem:[#allocation7 + $0x330] sm:$0xff]
    %v734 = vld [vmem:[#allocation7 + $0x338] sm:$0xff]
    %v735 = vld [vmem:[#allocation7 + $0x340] sm:$0xff]
    %v736 = vld [vmem:[#allocation7 + $0x348] sm:$0xff]
    %v737 = vld [vmem:[#allocation7 + $0x350] sm:$0xff]
    %v738 = vld [vmem:[#allocation7 + $0x358] sm:$0xff]
    %v739 = vld [vmem:[#allocation7 + $0x360] sm:$0xff]
    %v740 = vld [vmem:[#allocation7 + $0x368] sm:$0xff]
    %v741 = vld [vmem:[#allocation7 + $0x370] sm:$0xff]
    %v742 = vld [vmem:[#allocation7 + $0x378] sm:$0xff]
    %v743 = vld [vmem:[#allocation7 + $0x380] sm:$0xff]
    %v744 = vld [vmem:[#allocation7 + $0x388] sm:$0xff]
    %v745 = vld [vmem:[#allocation7 + $0x390] sm:$0xff]
    %v746 = vld [vmem:[#allocation7 + $0x398] sm:$0xff]
    %v747 = vld [vmem:[#allocation7 + $0x3a0] sm:$0xff]
    %v748 = vld [vmem:[#allocation7 + $0x3a8] sm:$0xff]
    %v749 = vld [vmem:[#allocation7 + $0x3b0] sm:$0xff]
    %v750 = vld [vmem:[#allocation7 + $0x3b8] sm:$0xff]
    %v751 = vld [vmem:[#allocation7 + $0x3c0] sm:$0xff]
    %v752 = vld [vmem:[#allocation7 + $0x3c8] sm:$0xff]
    %v753 = vld [vmem:[#allocation7 + $0x3d0] sm:$0xff]
    %v754 = vld [vmem:[#allocation7 + $0x3d8] sm:$0xff]
    %v755 = vld [vmem:[#allocation7 + $0x3e0] sm:$0xff]
    %v756 = vld [vmem:[#allocation7 + $0x3e8] sm:$0xff]
    %v757 = vld [vmem:[#allocation7 + $0x3f0] sm:$0xff]
    %v758 = vld [vmem:[#allocation7 + $0x3f8] sm:$0xff]
    %v759 = vld [vmem:[%s5] sm:$0xf]
    %v761 = vlaneseq
    %v762 = vshrl.u32 %v761, 7
    %v763 = vsub.s32 0, %v762
    %v764 = vrot.slane %v759, %v763
    %v765 = vlaneseq
    %v766 = vshrl.u32 %v765, 7
    %v767 = vsub.s32 1, %v766
    %v768 = vrot.slane %v759, %v767
    %v769 = vlaneseq
    %v770 = vshrl.u32 %v769, 7
    %v771 = vsub.s32 2, %v770
    %v772 = vrot.slane %v759, %v771
    %v773 = vlaneseq
    %v774 = vshrl.u32 %v773, 7
    %v775 = vsub.s32 3, %v774
    %v776 = vrot.slane %v759, %v775
    %v909 = vunpack.c.l.b16 %v631
    %v910 = vunpack.c.h.b16 %v631
    %v911 = vunpack.c.l.b16 %v632
    %v912 = vunpack.c.h.b16 %v632
    %v913 = vunpack.c.l.b16 %v633
    %v914 = vunpack.c.h.b16 %v633
    %v915 = vunpack.c.l.b16 %v634
    %v916 = vunpack.c.h.b16 %v634
    %v917 = vunpack.c.l.b16 %v635
    %v918 = vunpack.c.h.b16 %v635
    %v919 = vunpack.c.l.b16 %v636
    %v920 = vunpack.c.h.b16 %v636
    %v921 = vunpack.c.l.b16 %v637
    %v922 = vunpack.c.h.b16 %v637
    %v923 = vunpack.c.l.b16 %v638
    %v924 = vunpack.c.h.b16 %v638
    %v925 = vunpack.c.l.b16 %v639
    %v926 = vunpack.c.h.b16 %v639
    %v927 = vunpack.c.l.b16 %v640
    %v928 = vunpack.c.h.b16 %v640
    %v929 = vunpack.c.l.b16 %v641
    %v930 = vunpack.c.h.b16 %v641
    %v931 = vunpack.c.l.b16 %v642
    %v932 = vunpack.c.h.b16 %v642
    %v933 = vunpack.c.l.b16 %v643
    %v934 = vunpack.c.h.b16 %v643
    %v935 = vunpack.c.l.b16 %v644
    %v936 = vunpack.c.h.b16 %v644
    %v937 = vunpack.c.l.b16 %v645
    %v938 = vunpack.c.h.b16 %v645
    %v939 = vunpack.c.l.b16 %v646
    %v940 = vunpack.c.h.b16 %v646
    %v941 = vunpack.c.l.b16 %v647
    %v942 = vunpack.c.h.b16 %v647
    %v943 = vunpack.c.l.b16 %v648
    %v944 = vunpack.c.h.b16 %v648
    %v945 = vunpack.c.l.b16 %v649
    %v946 = vunpack.c.h.b16 %v649
    %v947 = vunpack.c.l.b16 %v650
    %v948 = vunpack.c.h.b16 %v650
    %v949 = vunpack.c.l.b16 %v651
    %v950 = vunpack.c.h.b16 %v651
    %v951 = vunpack.c.l.b16 %v652
    %v952 = vunpack.c.h.b16 %v652
    %v953 = vunpack.c.l.b16 %v653
    %v954 = vunpack.c.h.b16 %v653
    %v955 = vunpack.c.l.b16 %v654
    %v956 = vunpack.c.h.b16 %v654
    %v957 = vunpack.c.l.b16 %v655
    %v958 = vunpack.c.h.b16 %v655
    %v959 = vunpack.c.l.b16 %v656
    %v960 = vunpack.c.h.b16 %v656
    %v961 = vunpack.c.l.b16 %v657
    %v962 = vunpack.c.h.b16 %v657
    %v963 = vunpack.c.l.b16 %v658
    %v964 = vunpack.c.h.b16 %v658
    %v965 = vunpack.c.l.b16 %v659
    %v966 = vunpack.c.h.b16 %v659
    %v967 = vunpack.c.l.b16 %v660
    %v968 = vunpack.c.h.b16 %v660
    %v969 = vunpack.c.l.b16 %v661
    %v970 = vunpack.c.h.b16 %v661
    %v971 = vunpack.c.l.b16 %v662
    %v972 = vunpack.c.h.b16 %v662
    %v973 = vunpack.c.l.b16 %v663
    %v974 = vunpack.c.h.b16 %v663
    %v975 = vunpack.c.l.b16 %v664
    %v976 = vunpack.c.h.b16 %v664
    %v977 = vunpack.c.l.b16 %v665
    %v978 = vunpack.c.h.b16 %v665
    %v979 = vunpack.c.l.b16 %v666
    %v980 = vunpack.c.h.b16 %v666
    %v981 = vunpack.c.l.b16 %v667
    %v982 = vunpack.c.h.b16 %v667
    %v983 = vunpack.c.l.b16 %v668
    %v984 = vunpack.c.h.b16 %v668
    %v985 = vunpack.c.l.b16 %v669
    %v986 = vunpack.c.h.b16 %v669
    %v987 = vunpack.c.l.b16 %v670
    %v988 = vunpack.c.h.b16 %v670
    %v989 = vunpack.c.l.b16 %v671
    %v990 = vunpack.c.h.b16 %v671
    %v991 = vunpack.c.l.b16 %v672
    %v992 = vunpack.c.h.b16 %v672
    %v993 = vunpack.c.l.b16 %v673
    %v994 = vunpack.c.h.b16 %v673
    %v995 = vunpack.c.l.b16 %v674
    %v996 = vunpack.c.h.b16 %v674
    %v997 = vunpack.c.l.b16 %v675
    %v998 = vunpack.c.h.b16 %v675
    %v999 = vunpack.c.l.b16 %v676
    %v1000 = vunpack.c.h.b16 %v676
    %v1001 = vunpack.c.l.b16 %v677
    %v1002 = vunpack.c.h.b16 %v677
    %v1003 = vunpack.c.l.b16 %v678
    %v1004 = vunpack.c.h.b16 %v678
    %v1005 = vunpack.c.l.b16 %v679
    %v1006 = vunpack.c.h.b16 %v679
    %v1007 = vunpack.c.l.b16 %v680
    %v1008 = vunpack.c.h.b16 %v680
    %v1009 = vunpack.c.l.b16 %v681
    %v1010 = vunpack.c.h.b16 %v681
    %v1011 = vunpack.c.l.b16 %v682
    %v1012 = vunpack.c.h.b16 %v682
    %v1013 = vunpack.c.l.b16 %v683
    %v1014 = vunpack.c.h.b16 %v683
    %v1015 = vunpack.c.l.b16 %v684
    %v1016 = vunpack.c.h.b16 %v684
    %v1017 = vunpack.c.l.b16 %v685
    %v1018 = vunpack.c.h.b16 %v685
    %v1019 = vunpack.c.l.b16 %v686
    %v1020 = vunpack.c.h.b16 %v686
    %v1021 = vunpack.c.l.b16 %v687
    %v1022 = vunpack.c.h.b16 %v687
    %v1023 = vunpack.c.l.b16 %v688
    %v1024 = vunpack.c.h.b16 %v688
    %v1025 = vunpack.c.l.b16 %v689
    %v1026 = vunpack.c.h.b16 %v689
    %v1027 = vunpack.c.l.b16 %v690
    %v1028 = vunpack.c.h.b16 %v690
    %v1029 = vunpack.c.l.b16 %v691
    %v1030 = vunpack.c.h.b16 %v691
    %v1031 = vunpack.c.l.b16 %v692
    %v1032 = vunpack.c.h.b16 %v692
    %v1033 = vunpack.c.l.b16 %v693
    %v1034 = vunpack.c.h.b16 %v693
    %v1035 = vunpack.c.l.b16 %v694
    %v1036 = vunpack.c.h.b16 %v694
    %v1037 = vunpack.c.l.b16 %v695
    %v1038 = vunpack.c.h.b16 %v695
    %v1039 = vunpack.c.l.b16 %v696
    %v1040 = vunpack.c.h.b16 %v696
    %v1041 = vunpack.c.l.b16 %v697
    %v1042 = vunpack.c.h.b16 %v697
    %v1043 = vunpack.c.l.b16 %v698
    %v1044 = vunpack.c.h.b16 %v698
    %v1045 = vunpack.c.l.b16 %v699
    %v1046 = vunpack.c.h.b16 %v699
    %v1047 = vunpack.c.l.b16 %v700
    %v1048 = vunpack.c.h.b16 %v700
    %v1049 = vunpack.c.l.b16 %v701
    %v1050 = vunpack.c.h.b16 %v701
    %v1051 = vunpack.c.l.b16 %v702
    %v1052 = vunpack.c.h.b16 %v702
    %v1053 = vunpack.c.l.b16 %v703
    %v1054 = vunpack.c.h.b16 %v703
    %v1055 = vunpack.c.l.b16 %v704
    %v1056 = vunpack.c.h.b16 %v704
    %v1057 = vunpack.c.l.b16 %v705
    %v1058 = vunpack.c.h.b16 %v705
    %v1059 = vunpack.c.l.b16 %v706
    %v1060 = vunpack.c.h.b16 %v706
    %v1061 = vunpack.c.l.b16 %v707
    %v1062 = vunpack.c.h.b16 %v707
    %v1063 = vunpack.c.l.b16 %v708
    %v1064 = vunpack.c.h.b16 %v708
    %v1065 = vunpack.c.l.b16 %v709
    %v1066 = vunpack.c.h.b16 %v709
    %v1067 = vunpack.c.l.b16 %v710
    %v1068 = vunpack.c.h.b16 %v710
    %v1069 = vunpack.c.l.b16 %v711
    %v1070 = vunpack.c.h.b16 %v711
    %v1071 = vunpack.c.l.b16 %v712
    %v1072 = vunpack.c.h.b16 %v712
    %v1073 = vunpack.c.l.b16 %v713
    %v1074 = vunpack.c.h.b16 %v713
    %v1075 = vunpack.c.l.b16 %v714
    %v1076 = vunpack.c.h.b16 %v714
    %v1077 = vunpack.c.l.b16 %v715
    %v1078 = vunpack.c.h.b16 %v715
    %v1079 = vunpack.c.l.b16 %v716
    %v1080 = vunpack.c.h.b16 %v716
    %v1081 = vunpack.c.l.b16 %v717
    %v1082 = vunpack.c.h.b16 %v717
    %v1083 = vunpack.c.l.b16 %v718
    %v1084 = vunpack.c.h.b16 %v718
    %v1085 = vunpack.c.l.b16 %v719
    %v1086 = vunpack.c.h.b16 %v719
    %v1087 = vunpack.c.l.b16 %v720
    %v1088 = vunpack.c.h.b16 %v720
    %v1089 = vunpack.c.l.b16 %v721
    %v1090 = vunpack.c.h.b16 %v721
    %v1091 = vunpack.c.l.b16 %v722
    %v1092 = vunpack.c.h.b16 %v722
    %v1093 = vunpack.c.l.b16 %v723
    %v1094 = vunpack.c.h.b16 %v723
    %v1095 = vunpack.c.l.b16 %v724
    %v1096 = vunpack.c.h.b16 %v724
    %v1097 = vunpack.c.l.b16 %v725
    %v1098 = vunpack.c.h.b16 %v725
    %v1099 = vunpack.c.l.b16 %v726
    %v1100 = vunpack.c.h.b16 %v726
    %v1101 = vunpack.c.l.b16 %v727
    %v1102 = vunpack.c.h.b16 %v727
    %v1103 = vunpack.c.l.b16 %v728
    %v1104 = vunpack.c.h.b16 %v728
    %v1105 = vunpack.c.l.b16 %v729
    %v1106 = vunpack.c.h.b16 %v729
    %v1107 = vunpack.c.l.b16 %v730
    %v1108 = vunpack.c.h.b16 %v730
    %v1109 = vunpack.c.l.b16 %v731
    %v1110 = vunpack.c.h.b16 %v731
    %v1111 = vunpack.c.l.b16 %v732
    %v1112 = vunpack.c.h.b16 %v732
    %v1113 = vunpack.c.l.b16 %v733
    %v1114 = vunpack.c.h.b16 %v733
    %v1115 = vunpack.c.l.b16 %v734
    %v1116 = vunpack.c.h.b16 %v734
    %v1117 = vunpack.c.l.b16 %v735
    %v1118 = vunpack.c.h.b16 %v735
    %v1119 = vunpack.c.l.b16 %v736
    %v1120 = vunpack.c.h.b16 %v736
    %v1121 = vunpack.c.l.b16 %v737
    %v1122 = vunpack.c.h.b16 %v737
    %v1123 = vunpack.c.l.b16 %v738
    %v1124 = vunpack.c.h.b16 %v738
    %v1125 = vunpack.c.l.b16 %v739
    %v1126 = vunpack.c.h.b16 %v739
    %v1127 = vunpack.c.l.b16 %v740
    %v1128 = vunpack.c.h.b16 %v740
    %v1129 = vunpack.c.l.b16 %v741
    %v1130 = vunpack.c.h.b16 %v741
    %v1131 = vunpack.c.l.b16 %v742
    %v1132 = vunpack.c.h.b16 %v742
    %v1133 = vunpack.c.l.b16 %v743
    %v1134 = vunpack.c.h.b16 %v743
    %v1135 = vunpack.c.l.b16 %v744
    %v1136 = vunpack.c.h.b16 %v744
    %v1137 = vunpack.c.l.b16 %v745
    %v1138 = vunpack.c.h.b16 %v745
    %v1139 = vunpack.c.l.b16 %v746
    %v1140 = vunpack.c.h.b16 %v746
    %v1141 = vunpack.c.l.b16 %v747
    %v1142 = vunpack.c.h.b16 %v747
    %v1143 = vunpack.c.l.b16 %v748
    %v1144 = vunpack.c.h.b16 %v748
    %v1145 = vunpack.c.l.b16 %v749
    %v1146 = vunpack.c.h.b16 %v749
    %v1147 = vunpack.c.l.b16 %v750
    %v1148 = vunpack.c.h.b16 %v750
    %v1149 = vunpack.c.l.b16 %v751
    %v1150 = vunpack.c.h.b16 %v751
    %v1151 = vunpack.c.l.b16 %v752
    %v1152 = vunpack.c.h.b16 %v752
    %v1153 = vunpack.c.l.b16 %v753
    %v1154 = vunpack.c.h.b16 %v753
    %v1155 = vunpack.c.l.b16 %v754
    %v1156 = vunpack.c.h.b16 %v754
    %v1157 = vunpack.c.l.b16 %v755
    %v1158 = vunpack.c.h.b16 %v755
    %v1159 = vunpack.c.l.b16 %v756
    %v1160 = vunpack.c.h.b16 %v756
    %v1161 = vunpack.c.l.b16 %v757
    %v1162 = vunpack.c.h.b16 %v757
    %v1163 = vunpack.c.l.b16 %v758
    %v1164 = vunpack.c.h.b16 %v758
    %v1165 = vpack.c.b16 %v913, %v909
    %v1166 = vpack.c.b16 %v914, %v910
    %v1167 = vpack.c.b16 %v915, %v911
    %v1168 = vpack.c.b16 %v916, %v912
    %v1169 = vpack.c.b16 %v921, %v917
    %v1170 = vpack.c.b16 %v922, %v918
    %v1171 = vpack.c.b16 %v923, %v919
    %v1172 = vpack.c.b16 %v924, %v920
    %v1173 = vpack.c.b16 %v929, %v925
    %v1174 = vpack.c.b16 %v930, %v926
    %v1175 = vpack.c.b16 %v931, %v927
    %v1176 = vpack.c.b16 %v932, %v928
    %v1177 = vpack.c.b16 %v937, %v933
    %v1178 = vpack.c.b16 %v938, %v934
    %v1179 = vpack.c.b16 %v939, %v935
    %v1180 = vpack.c.b16 %v940, %v936
    %v1181 = vpack.c.b16 %v945, %v941
    %v1182 = vpack.c.b16 %v946, %v942
    %v1183 = vpack.c.b16 %v947, %v943
    %v1184 = vpack.c.b16 %v948, %v944
    %v1185 = vpack.c.b16 %v953, %v949
    %v1186 = vpack.c.b16 %v954, %v950
    %v1187 = vpack.c.b16 %v955, %v951
    %v1188 = vpack.c.b16 %v956, %v952
    %v1189 = vpack.c.b16 %v961, %v957
    %v1190 = vpack.c.b16 %v962, %v958
    %v1191 = vpack.c.b16 %v963, %v959
    %v1192 = vpack.c.b16 %v964, %v960
    %v1193 = vpack.c.b16 %v969, %v965
    %v1194 = vpack.c.b16 %v970, %v966
    %v1195 = vpack.c.b16 %v971, %v967
    %v1196 = vpack.c.b16 %v972, %v968
    %v1197 = vpack.c.b16 %v977, %v973
    %v1198 = vpack.c.b16 %v978, %v974
    %v1199 = vpack.c.b16 %v979, %v975
    %v1200 = vpack.c.b16 %v980, %v976
    %v1201 = vpack.c.b16 %v985, %v981
    %v1202 = vpack.c.b16 %v986, %v982
    %v1203 = vpack.c.b16 %v987, %v983
    %v1204 = vpack.c.b16 %v988, %v984
    %v1205 = vpack.c.b16 %v993, %v989
    %v1206 = vpack.c.b16 %v994, %v990
    %v1207 = vpack.c.b16 %v995, %v991
    %v1208 = vpack.c.b16 %v996, %v992
    %v1209 = vpack.c.b16 %v1001, %v997
    %v1210 = vpack.c.b16 %v1002, %v998
    %v1211 = vpack.c.b16 %v1003, %v999
    %v1212 = vpack.c.b16 %v1004, %v1000
    %v1213 = vpack.c.b16 %v1009, %v1005
    %v1214 = vpack.c.b16 %v1010, %v1006
    %v1215 = vpack.c.b16 %v1011, %v1007
    %v1216 = vpack.c.b16 %v1012, %v1008
    %v1217 = vpack.c.b16 %v1017, %v1013
    %v1218 = vpack.c.b16 %v1018, %v1014
    %v1219 = vpack.c.b16 %v1019, %v1015
    %v1220 = vpack.c.b16 %v1020, %v1016
    %v1221 = vpack.c.b16 %v1025, %v1021
    %v1222 = vpack.c.b16 %v1026, %v1022
    %v1223 = vpack.c.b16 %v1027, %v1023
    %v1224 = vpack.c.b16 %v1028, %v1024
    %v1225 = vpack.c.b16 %v1033, %v1029
    %v1226 = vpack.c.b16 %v1034, %v1030
    %v1227 = vpack.c.b16 %v1035, %v1031
    %v1228 = vpack.c.b16 %v1036, %v1032
    %v1229 = vpack.c.b16 %v1041, %v1037
    %v1230 = vpack.c.b16 %v1042, %v1038
    %v1231 = vpack.c.b16 %v1043, %v1039
    %v1232 = vpack.c.b16 %v1044, %v1040
    %v1233 = vpack.c.b16 %v1049, %v1045
    %v1234 = vpack.c.b16 %v1050, %v1046
    %v1235 = vpack.c.b16 %v1051, %v1047
    %v1236 = vpack.c.b16 %v1052, %v1048
    %v1237 = vpack.c.b16 %v1057, %v1053
    %v1238 = vpack.c.b16 %v1058, %v1054
    %v1239 = vpack.c.b16 %v1059, %v1055
    %v1240 = vpack.c.b16 %v1060, %v1056
    %v1241 = vpack.c.b16 %v1065, %v1061
    %v1242 = vpack.c.b16 %v1066, %v1062
    %v1243 = vpack.c.b16 %v1067, %v1063
    %v1244 = vpack.c.b16 %v1068, %v1064
    %v1245 = vpack.c.b16 %v1073, %v1069
    %v1246 = vpack.c.b16 %v1074, %v1070
    %v1247 = vpack.c.b16 %v1075, %v1071
    %v1248 = vpack.c.b16 %v1076, %v1072
    %v1249 = vpack.c.b16 %v1081, %v1077
    %v1250 = vpack.c.b16 %v1082, %v1078
    %v1251 = vpack.c.b16 %v1083, %v1079
    %v1252 = vpack.c.b16 %v1084, %v1080
    %v1253 = vpack.c.b16 %v1089, %v1085
    %v1254 = vpack.c.b16 %v1090, %v1086
    %v1255 = vpack.c.b16 %v1091, %v1087
    %v1256 = vpack.c.b16 %v1092, %v1088
    %v1257 = vpack.c.b16 %v1097, %v1093
    %v1258 = vpack.c.b16 %v1098, %v1094
    %v1259 = vpack.c.b16 %v1099, %v1095
    %v1260 = vpack.c.b16 %v1100, %v1096
    %v1261 = vpack.c.b16 %v1105, %v1101
    %v1262 = vpack.c.b16 %v1106, %v1102
    %v1263 = vpack.c.b16 %v1107, %v1103
    %v1264 = vpack.c.b16 %v1108, %v1104
    %v1265 = vpack.c.b16 %v1113, %v1109
    %v1266 = vpack.c.b16 %v1114, %v1110
    %v1267 = vpack.c.b16 %v1115, %v1111
    %v1268 = vpack.c.b16 %v1116, %v1112
    %v1269 = vpack.c.b16 %v1121, %v1117
    %v1270 = vpack.c.b16 %v1122, %v1118
    %v1271 = vpack.c.b16 %v1123, %v1119
    %v1272 = vpack.c.b16 %v1124, %v1120
    %v1273 = vpack.c.b16 %v1129, %v1125
    %v1274 = vpack.c.b16 %v1130, %v1126
    %v1275 = vpack.c.b16 %v1131, %v1127
    %v1276 = vpack.c.b16 %v1132, %v1128
    %v1277 = vpack.c.b16 %v1137, %v1133
    %v1278 = vpack.c.b16 %v1138, %v1134
    %v1279 = vpack.c.b16 %v1139, %v1135
    %v1280 = vpack.c.b16 %v1140, %v1136
    %v1281 = vpack.c.b16 %v1145, %v1141
    %v1282 = vpack.c.b16 %v1146, %v1142
    %v1283 = vpack.c.b16 %v1147, %v1143
    %v1284 = vpack.c.b16 %v1148, %v1144
    %v1285 = vpack.c.b16 %v1153, %v1149
    %v1286 = vpack.c.b16 %v1154, %v1150
    %v1287 = vpack.c.b16 %v1155, %v1151
    %v1288 = vpack.c.b16 %v1156, %v1152
    %v1289 = vpack.c.b16 %v1161, %v1157
    %v1290 = vpack.c.b16 %v1162, %v1158
    %v1291 = vpack.c.b16 %v1163, %v1159
    %v1292 = vpack.c.b16 %v1164, %v1160
    %1421 = vmatprep.subr.bf16.mxu0 %v1166
    %1422 = vmatpush1.bf16.msra.mxu0 %v1165
    %1423 = vmatprep.subr.bf16.mxu0 %v1170
    %1424 = vmatpush1.bf16.msra.mxu0 %v1169
    %1425 = vmatprep.subr.bf16.mxu0 %v1174
    %1426 = vmatpush1.bf16.msra.mxu0 %v1173
    %1427 = vmatprep.subr.bf16.mxu0 %v1178
    %1428 = vmatpush1.bf16.msra.mxu0 %v1177
    %1429 = vmatprep.subr.bf16.mxu0 %v1182
    %1430 = vmatpush1.bf16.msra.mxu0 %v1181
    %1431 = vmatprep.subr.bf16.mxu0 %v1186
    %1432 = vmatpush1.bf16.msra.mxu0 %v1185
    %1433 = vmatprep.subr.bf16.mxu0 %v1190
    %1434 = vmatpush1.bf16.msra.mxu0 %v1189
    %1435 = vmatprep.subr.bf16.mxu0 %v1194
    %1436 = vmatpush1.bf16.msra.mxu0 %v1193
    %1437 = vmatprep.subr.bf16.mxu0 %v1198
    %1438 = vmatpush1.bf16.msra.mxu0 %v1197
    %1439 = vmatprep.subr.bf16.mxu0 %v1202
    %1440 = vmatpush1.bf16.msra.mxu0 %v1201
    %1441 = vmatprep.subr.bf16.mxu0 %v1206
    %1442 = vmatpush1.bf16.msra.mxu0 %v1205
    %1443 = vmatprep.subr.bf16.mxu0 %v1210
    %1444 = vmatpush1.bf16.msra.mxu0 %v1209
    %1445 = vmatprep.subr.bf16.mxu0 %v1214
    %1446 = vmatpush1.bf16.msra.mxu0 %v1213
    %1447 = vmatprep.subr.bf16.mxu0 %v1218
    %1448 = vmatpush1.bf16.msra.mxu0 %v1217
    %1449 = vmatprep.subr.bf16.mxu0 %v1222
    %1450 = vmatpush1.bf16.msra.mxu0 %v1221
    %1451 = vmatprep.subr.bf16.mxu0 %v1226
    %1452 = vmatpush1.bf16.msra.mxu0 %v1225
    %1453 = vmatprep.mubr.bf16.mxu0 %v628
    %1454 = vmatmul.mubr.bf16.gmra.mrb[0].mxu0 %v627
    %v1455 = vpop.f32.mrb[0].mxu0
    %v1456 = vadd.f32 %v764, %v1455
    %v1457 = vpop.f32.mrb[0].mxu0
    %v1458 = vadd.f32 %v768, %v1457
    %v1459 = vpop.f32.mrb[0].mxu0
    %v1460 = vadd.f32 %v764, %v1459
    %v1461 = vpop.f32.mrb[0].mxu0
    %v1462 = vadd.f32 %v768, %v1461
    %1463 = vdwg.mxu0
    %1464 = vmatprep.subr.bf16.mxu0 %v1230
    %1465 = vmatpush1.bf16.msra.mxu0 %v1229
    %1466 = vmatprep.subr.bf16.mxu0 %v1234
    %1467 = vmatpush1.bf16.msra.mxu0 %v1233
    %1468 = vmatprep.subr.bf16.mxu0 %v1238
    %1469 = vmatpush1.bf16.msra.mxu0 %v1237
    %1470 = vmatprep.subr.bf16.mxu0 %v1242
    %1471 = vmatpush1.bf16.msra.mxu0 %v1241
    %1472 = vmatprep.subr.bf16.mxu0 %v1246
    %1473 = vmatpush1.bf16.msra.mxu0 %v1245
    %1474 = vmatprep.subr.bf16.mxu0 %v1250
    %1475 = vmatpush1.bf16.msra.mxu0 %v1249
    %1476 = vmatprep.subr.bf16.mxu0 %v1254
    %1477 = vmatpush1.bf16.msra.mxu0 %v1253
    %1478 = vmatprep.subr.bf16.mxu0 %v1258
    %1479 = vmatpush1.bf16.msra.mxu0 %v1257
    %1480 = vmatprep.subr.bf16.mxu0 %v1262
    %1481 = vmatpush1.bf16.msra.mxu0 %v1261
    %1482 = vmatprep.subr.bf16.mxu0 %v1266
    %1483 = vmatpush1.bf16.msra.mxu0 %v1265
    %1484 = vmatprep.subr.bf16.mxu0 %v1270
    %1485 = vmatpush1.bf16.msra.mxu0 %v1269
    %1486 = vmatprep.subr.bf16.mxu0 %v1274
    %1487 = vmatpush1.bf16.msra.mxu0 %v1273
    %1488 = vmatprep.subr.bf16.mxu0 %v1278
    %1489 = vmatpush1.bf16.msra.mxu0 %v1277
    %1490 = vmatprep.subr.bf16.mxu0 %v1282
    %1491 = vmatpush1.bf16.msra.mxu0 %v1281
    %1492 = vmatprep.subr.bf16.mxu0 %v1286
    %1493 = vmatpush1.bf16.msra.mxu0 %v1285
    %1494 = vmatprep.subr.bf16.mxu0 %v1290
    %1495 = vmatpush1.bf16.msra.mxu0 %v1289
    %1496 = vmatprep.mubr.bf16.mxu0 %v630
    %1497 = vmatmul.mubr.bf16.gmra.mrb[0].mxu0 %v629
    %v1498 = vpop.f32.mrb[0].mxu0
    %v1499 = vadd.f32 %v1456, %v1498
    %v1500 = vpop.f32.mrb[0].mxu0
    %v1501 = vadd.f32 %v1458, %v1500
    %v1502 = vpop.f32.mrb[0].mxu0
    %v1503 = vadd.f32 %v1460, %v1502
    %v1504 = vpop.f32.mrb[0].mxu0
    %v1505 = vadd.f32 %v1462, %v1504
    %1506 = vdwg.mxu0
    %1507 = vmatprep.subr.bf16.mxu0 %v1168
    %1508 = vmatpush1.bf16.msra.mxu0 %v1167
    %1509 = vmatprep.subr.bf16.mxu0 %v1172
    %1510 = vmatpush1.bf16.msra.mxu0 %v1171
    %1511 = vmatprep.subr.bf16.mxu0 %v1176
    %1512 = vmatpush1.bf16.msra.mxu0 %v1175
    %1513 = vmatprep.subr.bf16.mxu0 %v1180
    %1514 = vmatpush1.bf16.msra.mxu0 %v1179
    %1515 = vmatprep.subr.bf16.mxu0 %v1184
    %1516 = vmatpush1.bf16.msra.mxu0 %v1183
    %1517 = vmatprep.subr.bf16.mxu0 %v1188
    %1518 = vmatpush1.bf16.msra.mxu0 %v1187
    %1519 = vmatprep.subr.bf16.mxu0 %v1192
    %1520 = vmatpush1.bf16.msra.mxu0 %v1191
    %1521 = vmatprep.subr.bf16.mxu0 %v1196
    %1522 = vmatpush1.bf16.msra.mxu0 %v1195
    %1523 = vmatprep.subr.bf16.mxu0 %v1200
    %1524 = vmatpush1.bf16.msra.mxu0 %v1199
    %1525 = vmatprep.subr.bf16.mxu0 %v1204
    %1526 = vmatpush1.bf16.msra.mxu0 %v1203
    %1527 = vmatprep.subr.bf16.mxu0 %v1208
    %1528 = vmatpush1.bf16.msra.mxu0 %v1207
    %1529 = vmatprep.subr.bf16.mxu0 %v1212
    %1530 = vmatpush1.bf16.msra.mxu0 %v1211
    %1531 = vmatprep.subr.bf16.mxu0 %v1216
    %1532 = vmatpush1.bf16.msra.mxu0 %v1215
    %1533 = vmatprep.subr.bf16.mxu0 %v1220
    %1534 = vmatpush1.bf16.msra.mxu0 %v1219
    %1535 = vmatprep.subr.bf16.mxu0 %v1224
    %1536 = vmatpush1.bf16.msra.mxu0 %v1223
    %1537 = vmatprep.subr.bf16.mxu0 %v1228
    %1538 = vmatpush1.bf16.msra.mxu0 %v1227
    %1539 = vmatprep.mubr.bf16.mxu0 %v628
    %1540 = vmatmul.mubr.bf16.gmra.mrb[0].mxu0 %v627
    %v1541 = vpop.f32.mrb[0].mxu0
    %v1542 = vadd.f32 %v772, %v1541
    %v1543 = vpop.f32.mrb[0].mxu0
    %v1544 = vadd.f32 %v776, %v1543
    %v1545 = vpop.f32.mrb[0].mxu0
    %v1546 = vadd.f32 %v772, %v1545
    %v1547 = vpop.f32.mrb[0].mxu0
    %v1548 = vadd.f32 %v776, %v1547
    %1549 = vdwg.mxu0
    %1550 = vmatprep.subr.bf16.mxu0 %v1232
    %1551 = vmatpush1.bf16.msra.mxu0 %v1231
    %1552 = vmatprep.subr.bf16.mxu0 %v1236
    %1553 = vmatpush1.bf16.msra.mxu0 %v1235
    %1554 = vmatprep.subr.bf16.mxu0 %v1240
    %1555 = vmatpush1.bf16.msra.mxu0 %v1239
    %1556 = vmatprep.subr.bf16.mxu0 %v1244
    %1557 = vmatpush1.bf16.msra.mxu0 %v1243
    %1558 = vmatprep.subr.bf16.mxu0 %v1248
    %1559 = vmatpush1.bf16.msra.mxu0 %v1247
    %1560 = vmatprep.subr.bf16.mxu0 %v1252
    %1561 = vmatpush1.bf16.msra.mxu0 %v1251
    %1562 = vmatprep.subr.bf16.mxu0 %v1256
    %1563 = vmatpush1.bf16.msra.mxu0 %v1255
    %1564 = vmatprep.subr.bf16.mxu0 %v1260
    %1565 = vmatpush1.bf16.msra.mxu0 %v1259
    %1566 = vmatprep.subr.bf16.mxu0 %v1264
    %1567 = vmatpush1.bf16.msra.mxu0 %v1263
    %1568 = vmatprep.subr.bf16.mxu0 %v1268
    %1569 = vmatpush1.bf16.msra.mxu0 %v1267
    %1570 = vmatprep.subr.bf16.mxu0 %v1272
    %1571 = vmatpush1.bf16.msra.mxu0 %v1271
    %1572 = vmatprep.subr.bf16.mxu0 %v1276
    %1573 = vmatpush1.bf16.msra.mxu0 %v1275
    %1574 = vmatprep.subr.bf16.mxu0 %v1280
    %1575 = vmatpush1.bf16.msra.mxu0 %v1279
    %1576 = vmatprep.subr.bf16.mxu0 %v1284
    %1577 = vmatpush1.bf16.msra.mxu0 %v1283
    %1578 = vmatprep.subr.bf16.mxu0 %v1288
    %1579 = vmatpush1.bf16.msra.mxu0 %v1287
    %1580 = vmatprep.subr.bf16.mxu0 %v1292
    %1581 = vmatpush1.bf16.msra.mxu0 %v1291
    %1582 = vmatprep.mubr.bf16.mxu0 %v630
    %1583 = vmatmul.mubr.bf16.gmra.mrb[0].mxu0 %v629
    %v1584 = vpop.f32.mrb[0].mxu0
    %v1585 = vadd.f32 %v1542, %v1584
    %v1586 = vpop.f32.mrb[0].mxu0
    %v1587 = vadd.f32 %v1544, %v1586
    %v1588 = vpop.f32.mrb[0].mxu0
    %v1589 = vadd.f32 %v1546, %v1588
    %v1590 = vpop.f32.mrb[0].mxu0
    %v1591 = vadd.f32 %v1548, %v1590
    %1592 = vdwg.mxu0
    %vm1593 = vcmp.gt.f32.partialorder %v1499, 0.0
    %vm1594 = vcmp.gt.f32.partialorder %v1501, 0.0
    %vm1595 = vcmp.gt.f32.partialorder %v1585, 0.0
    %vm1596 = vcmp.gt.f32.partialorder %v1587, 0.0
    %vm1597 = vcmp.gt.f32.partialorder %v1503, 0.0
    %vm1598 = vcmp.gt.f32.partialorder %v1505, 0.0
    %vm1599 = vcmp.gt.f32.partialorder %v1589, 0.0
    %vm1600 = vcmp.gt.f32.partialorder %v1591, 0.0
    %v1601 = vmul.f32 %v1499, 0.2
    %v1602 = vmul.f32 %v1501, 0.2
    %v1603 = vmul.f32 %v1585, 0.2
    %v1604 = vmul.f32 %v1587, 0.2
    %v1605 = vmul.f32 %v1503, 0.2
    %v1606 = vmul.f32 %v1505, 0.2
    %v1607 = vmul.f32 %v1589, 0.2
    %v1608 = vmul.f32 %v1591, 0.2
    %v1609 = vsel %vm1593, %v1499, %v1601
    %v1610 = vsel %vm1594, %v1501, %v1602
    %v1611 = vsel %vm1595, %v1585, %v1603
    %v1612 = vsel %vm1596, %v1587, %v1604
    %v1613 = vsel %vm1597, %v1503, %v1605
    %v1614 = vsel %vm1598, %v1505, %v1606
    %v1615 = vsel %vm1599, %v1589, %v1607
    %v1616 = vsel %vm1600, %v1591, %v1608
    %v1617 = vpack.c.bf16 %v1613, %v1609
    %v1618 = vpack.c.bf16 %v1614, %v1610
    %v1619 = vpack.c.bf16 %v1615, %v1611
    %v1620 = vpack.c.bf16 %v1616, %v1612
    %v1621 = vld [vmem:[#allocation8] sm:$0xff]
    %v1622 = vld [vmem:[#allocation8 + $0x8] sm:$0xff]
    %v1623 = vld [vmem:[#allocation8 + $0x10] sm:$0xff]
    %v1624 = vld [vmem:[#allocation8 + $0x18] sm:$0xff]
    %v1625 = vld [vmem:[#allocation8 + $0x20] sm:$0xff]
    %v1626 = vld [vmem:[#allocation8 + $0x28] sm:$0xff]
    %v1627 = vld [vmem:[#allocation8 + $0x30] sm:$0xff]
    %v1628 = vld [vmem:[#allocation8 + $0x38] sm:$0xff]
    %v1629 = vld [vmem:[#allocation8 + $0x40] sm:$0xff]
    %v1630 = vld [vmem:[#allocation8 + $0x48] sm:$0xff]
    %v1631 = vld [vmem:[#allocation8 + $0x50] sm:$0xff]
    %v1632 = vld [vmem:[#allocation8 + $0x58] sm:$0xff]
    %v1633 = vld [vmem:[#allocation8 + $0x60] sm:$0xff]
    %v1634 = vld [vmem:[#allocation8 + $0x68] sm:$0xff]
    %v1635 = vld [vmem:[#allocation8 + $0x70] sm:$0xff]
    %v1636 = vld [vmem:[#allocation8 + $0x78] sm:$0xff]
    %v1637 = vld [vmem:[#allocation8 + $0x80] sm:$0xff]
    %v1638 = vld [vmem:[#allocation8 + $0x88] sm:$0xff]
    %v1639 = vld [vmem:[#allocation8 + $0x90] sm:$0xff]
    %v1640 = vld [vmem:[#allocation8 + $0x98] sm:$0xff]
    %v1641 = vld [vmem:[#allocation8 + $0xa0] sm:$0xff]
    %v1642 = vld [vmem:[#allocation8 + $0xa8] sm:$0xff]
    %v1643 = vld [vmem:[#allocation8 + $0xb0] sm:$0xff]
    %v1644 = vld [vmem:[#allocation8 + $0xb8] sm:$0xff]
    %v1645 = vld [vmem:[#allocation8 + $0xc0] sm:$0xff]
    %v1646 = vld [vmem:[#allocation8 + $0xc8] sm:$0xff]
    %v1647 = vld [vmem:[#allocation8 + $0xd0] sm:$0xff]
    %v1648 = vld [vmem:[#allocation8 + $0xd8] sm:$0xff]
    %v1649 = vld [vmem:[#allocation8 + $0xe0] sm:$0xff]
    %v1650 = vld [vmem:[#allocation8 + $0xe8] sm:$0xff]
    %v1651 = vld [vmem:[#allocation8 + $0xf0] sm:$0xff]
    %v1652 = vld [vmem:[#allocation8 + $0xf8] sm:$0xff]
    %v1653 = vld [vmem:[#allocation8 + $0x100] sm:$0xff]
    %v1654 = vld [vmem:[#allocation8 + $0x108] sm:$0xff]
    %v1655 = vld [vmem:[#allocation8 + $0x110] sm:$0xff]
    %v1656 = vld [vmem:[#allocation8 + $0x118] sm:$0xff]
    %v1657 = vld [vmem:[#allocation8 + $0x120] sm:$0xff]
    %v1658 = vld [vmem:[#allocation8 + $0x128] sm:$0xff]
    %v1659 = vld [vmem:[#allocation8 + $0x130] sm:$0xff]
    %v1660 = vld [vmem:[#allocation8 + $0x138] sm:$0xff]
    %v1661 = vld [vmem:[#allocation8 + $0x140] sm:$0xff]
    %v1662 = vld [vmem:[#allocation8 + $0x148] sm:$0xff]
    %v1663 = vld [vmem:[#allocation8 + $0x150] sm:$0xff]
    %v1664 = vld [vmem:[#allocation8 + $0x158] sm:$0xff]
    %v1665 = vld [vmem:[#allocation8 + $0x160] sm:$0xff]
    %v1666 = vld [vmem:[#allocation8 + $0x168] sm:$0xff]
    %v1667 = vld [vmem:[#allocation8 + $0x170] sm:$0xff]
    %v1668 = vld [vmem:[#allocation8 + $0x178] sm:$0xff]
    %v1669 = vld [vmem:[#allocation8 + $0x180] sm:$0xff]
    %v1670 = vld [vmem:[#allocation8 + $0x188] sm:$0xff]
    %v1671 = vld [vmem:[#allocation8 + $0x190] sm:$0xff]
    %v1672 = vld [vmem:[#allocation8 + $0x198] sm:$0xff]
    %v1673 = vld [vmem:[#allocation8 + $0x1a0] sm:$0xff]
    %v1674 = vld [vmem:[#allocation8 + $0x1a8] sm:$0xff]
    %v1675 = vld [vmem:[#allocation8 + $0x1b0] sm:$0xff]
    %v1676 = vld [vmem:[#allocation8 + $0x1b8] sm:$0xff]
    %v1677 = vld [vmem:[#allocation8 + $0x1c0] sm:$0xff]
    %v1678 = vld [vmem:[#allocation8 + $0x1c8] sm:$0xff]
    %v1679 = vld [vmem:[#allocation8 + $0x1d0] sm:$0xff]
    %v1680 = vld [vmem:[#allocation8 + $0x1d8] sm:$0xff]
    %v1681 = vld [vmem:[#allocation8 + $0x1e0] sm:$0xff]
    %v1682 = vld [vmem:[#allocation8 + $0x1e8] sm:$0xff]
    %v1683 = vld [vmem:[#allocation8 + $0x1f0] sm:$0xff]
    %v1684 = vld [vmem:[#allocation8 + $0x1f8] sm:$0xff]
    %v1685 = vld [vmem:[#allocation8 + $0x200] sm:$0xff]
    %v1686 = vld [vmem:[#allocation8 + $0x208] sm:$0xff]
    %v1687 = vld [vmem:[#allocation8 + $0x210] sm:$0xff]
    %v1688 = vld [vmem:[#allocation8 + $0x218] sm:$0xff]
    %v1689 = vld [vmem:[#allocation8 + $0x220] sm:$0xff]
    %v1690 = vld [vmem:[#allocation8 + $0x228] sm:$0xff]
    %v1691 = vld [vmem:[#allocation8 + $0x230] sm:$0xff]
    %v1692 = vld [vmem:[#allocation8 + $0x238] sm:$0xff]
    %v1693 = vld [vmem:[#allocation8 + $0x240] sm:$0xff]
    %v1694 = vld [vmem:[#allocation8 + $0x248] sm:$0xff]
    %v1695 = vld [vmem:[#allocation8 + $0x250] sm:$0xff]
    %v1696 = vld [vmem:[#allocation8 + $0x258] sm:$0xff]
    %v1697 = vld [vmem:[#allocation8 + $0x260] sm:$0xff]
    %v1698 = vld [vmem:[#allocation8 + $0x268] sm:$0xff]
    %v1699 = vld [vmem:[#allocation8 + $0x270] sm:$0xff]
    %v1700 = vld [vmem:[#allocation8 + $0x278] sm:$0xff]
    %v1701 = vld [vmem:[#allocation8 + $0x280] sm:$0xff]
    %v1702 = vld [vmem:[#allocation8 + $0x288] sm:$0xff]
    %v1703 = vld [vmem:[#allocation8 + $0x290] sm:$0xff]
    %v1704 = vld [vmem:[#allocation8 + $0x298] sm:$0xff]
    %v1705 = vld [vmem:[#allocation8 + $0x2a0] sm:$0xff]
    %v1706 = vld [vmem:[#allocation8 + $0x2a8] sm:$0xff]
    %v1707 = vld [vmem:[#allocation8 + $0x2b0] sm:$0xff]
    %v1708 = vld [vmem:[#allocation8 + $0x2b8] sm:$0xff]
    %v1709 = vld [vmem:[#allocation8 + $0x2c0] sm:$0xff]
    %v1710 = vld [vmem:[#allocation8 + $0x2c8] sm:$0xff]
    %v1711 = vld [vmem:[#allocation8 + $0x2d0] sm:$0xff]
    %v1712 = vld [vmem:[#allocation8 + $0x2d8] sm:$0xff]
    %v1713 = vld [vmem:[#allocation8 + $0x2e0] sm:$0xff]
    %v1714 = vld [vmem:[#allocation8 + $0x2e8] sm:$0xff]
    %v1715 = vld [vmem:[#allocation8 + $0x2f0] sm:$0xff]
    %v1716 = vld [vmem:[#allocation8 + $0x2f8] sm:$0xff]
    %v1717 = vld [vmem:[#allocation8 + $0x300] sm:$0xff]
    %v1718 = vld [vmem:[#allocation8 + $0x308] sm:$0xff]
    %v1719 = vld [vmem:[#allocation8 + $0x310] sm:$0xff]
    %v1720 = vld [vmem:[#allocation8 + $0x318] sm:$0xff]
    %v1721 = vld [vmem:[#allocation8 + $0x320] sm:$0xff]
    %v1722 = vld [vmem:[#allocation8 + $0x328] sm:$0xff]
    %v1723 = vld [vmem:[#allocation8 + $0x330] sm:$0xff]
    %v1724 = vld [vmem:[#allocation8 + $0x338] sm:$0xff]
    %v1725 = vld [vmem:[#allocation8 + $0x340] sm:$0xff]
    %v1726 = vld [vmem:[#allocation8 + $0x348] sm:$0xff]
    %v1727 = vld [vmem:[#allocation8 + $0x350] sm:$0xff]
    %v1728 = vld [vmem:[#allocation8 + $0x358] sm:$0xff]
    %v1729 = vld [vmem:[#allocation8 + $0x360] sm:$0xff]
    %v1730 = vld [vmem:[#allocation8 + $0x368] sm:$0xff]
    %v1731 = vld [vmem:[#allocation8 + $0x370] sm:$0xff]
    %v1732 = vld [vmem:[#allocation8 + $0x378] sm:$0xff]
    %v1733 = vld [vmem:[#allocation8 + $0x380] sm:$0xff]
    %v1734 = vld [vmem:[#allocation8 + $0x388] sm:$0xff]
    %v1735 = vld [vmem:[#allocation8 + $0x390] sm:$0xff]
    %v1736 = vld [vmem:[#allocation8 + $0x398] sm:$0xff]
    %v1737 = vld [vmem:[#allocation8 + $0x3a0] sm:$0xff]
    %v1738 = vld [vmem:[#allocation8 + $0x3a8] sm:$0xff]
    %v1739 = vld [vmem:[#allocation8 + $0x3b0] sm:$0xff]
    %v1740 = vld [vmem:[#allocation8 + $0x3b8] sm:$0xff]
    %v1741 = vld [vmem:[#allocation8 + $0x3c0] sm:$0xff]
    %v1742 = vld [vmem:[#allocation8 + $0x3c8] sm:$0xff]
    %v1743 = vld [vmem:[#allocation8 + $0x3d0] sm:$0xff]
    %v1744 = vld [vmem:[#allocation8 + $0x3d8] sm:$0xff]
    %v1745 = vld [vmem:[#allocation8 + $0x3e0] sm:$0xff]
    %v1746 = vld [vmem:[#allocation8 + $0x3e8] sm:$0xff]
    %v1747 = vld [vmem:[#allocation8 + $0x3f0] sm:$0xff]
    %v1748 = vld [vmem:[#allocation8 + $0x3f8] sm:$0xff]
    %v1749 = vld [vmem:[%s7] sm:$0xf]
    %v1751 = vlaneseq
    %v1752 = vshrl.u32 %v1751, 7
    %v1753 = vsub.s32 0, %v1752
    %v1754 = vrot.slane %v1749, %v1753
    %v1755 = vlaneseq
    %v1756 = vshrl.u32 %v1755, 7
    %v1757 = vsub.s32 1, %v1756
    %v1758 = vrot.slane %v1749, %v1757
    %v1759 = vlaneseq
    %v1760 = vshrl.u32 %v1759, 7
    %v1761 = vsub.s32 2, %v1760
    %v1762 = vrot.slane %v1749, %v1761
    %v1763 = vlaneseq
    %v1764 = vshrl.u32 %v1763, 7
    %v1765 = vsub.s32 3, %v1764
    %v1766 = vrot.slane %v1749, %v1765
    %v1899 = vunpack.c.l.b16 %v1621
    %v1900 = vunpack.c.h.b16 %v1621
    %v1901 = vunpack.c.l.b16 %v1622
    %v1902 = vunpack.c.h.b16 %v1622
    %v1903 = vunpack.c.l.b16 %v1623
    %v1904 = vunpack.c.h.b16 %v1623
    %v1905 = vunpack.c.l.b16 %v1624
    %v1906 = vunpack.c.h.b16 %v1624
    %v1907 = vunpack.c.l.b16 %v1625
    %v1908 = vunpack.c.h.b16 %v1625
    %v1909 = vunpack.c.l.b16 %v1626
    %v1910 = vunpack.c.h.b16 %v1626
    %v1911 = vunpack.c.l.b16 %v1627
    %v1912 = vunpack.c.h.b16 %v1627
    %v1913 = vunpack.c.l.b16 %v1628
    %v1914 = vunpack.c.h.b16 %v1628
    %v1915 = vunpack.c.l.b16 %v1629
    %v1916 = vunpack.c.h.b16 %v1629
    %v1917 = vunpack.c.l.b16 %v1630
    %v1918 = vunpack.c.h.b16 %v1630
    %v1919 = vunpack.c.l.b16 %v1631
    %v1920 = vunpack.c.h.b16 %v1631
    %v1921 = vunpack.c.l.b16 %v1632
    %v1922 = vunpack.c.h.b16 %v1632
    %v1923 = vunpack.c.l.b16 %v1633
    %v1924 = vunpack.c.h.b16 %v1633
    %v1925 = vunpack.c.l.b16 %v1634
    %v1926 = vunpack.c.h.b16 %v1634
    %v1927 = vunpack.c.l.b16 %v1635
    %v1928 = vunpack.c.h.b16 %v1635
    %v1929 = vunpack.c.l.b16 %v1636
    %v1930 = vunpack.c.h.b16 %v1636
    %v1931 = vunpack.c.l.b16 %v1637
    %v1932 = vunpack.c.h.b16 %v1637
    %v1933 = vunpack.c.l.b16 %v1638
    %v1934 = vunpack.c.h.b16 %v1638
    %v1935 = vunpack.c.l.b16 %v1639
    %v1936 = vunpack.c.h.b16 %v1639
    %v1937 = vunpack.c.l.b16 %v1640
    %v1938 = vunpack.c.h.b16 %v1640
    %v1939 = vunpack.c.l.b16 %v1641
    %v1940 = vunpack.c.h.b16 %v1641
    %v1941 = vunpack.c.l.b16 %v1642
    %v1942 = vunpack.c.h.b16 %v1642
    %v1943 = vunpack.c.l.b16 %v1643
    %v1944 = vunpack.c.h.b16 %v1643
    %v1945 = vunpack.c.l.b16 %v1644
    %v1946 = vunpack.c.h.b16 %v1644
    %v1947 = vunpack.c.l.b16 %v1645
    %v1948 = vunpack.c.h.b16 %v1645
    %v1949 = vunpack.c.l.b16 %v1646
    %v1950 = vunpack.c.h.b16 %v1646
    %v1951 = vunpack.c.l.b16 %v1647
    %v1952 = vunpack.c.h.b16 %v1647
    %v1953 = vunpack.c.l.b16 %v1648
    %v1954 = vunpack.c.h.b16 %v1648
    %v1955 = vunpack.c.l.b16 %v1649
    %v1956 = vunpack.c.h.b16 %v1649
    %v1957 = vunpack.c.l.b16 %v1650
    %v1958 = vunpack.c.h.b16 %v1650
    %v1959 = vunpack.c.l.b16 %v1651
    %v1960 = vunpack.c.h.b16 %v1651
    %v1961 = vunpack.c.l.b16 %v1652
    %v1962 = vunpack.c.h.b16 %v1652
    %v1963 = vunpack.c.l.b16 %v1653
    %v1964 = vunpack.c.h.b16 %v1653
    %v1965 = vunpack.c.l.b16 %v1654
    %v1966 = vunpack.c.h.b16 %v1654
    %v1967 = vunpack.c.l.b16 %v1655
    %v1968 = vunpack.c.h.b16 %v1655
    %v1969 = vunpack.c.l.b16 %v1656
    %v1970 = vunpack.c.h.b16 %v1656
    %v1971 = vunpack.c.l.b16 %v1657
    %v1972 = vunpack.c.h.b16 %v1657
    %v1973 = vunpack.c.l.b16 %v1658
    %v1974 = vunpack.c.h.b16 %v1658
    %v1975 = vunpack.c.l.b16 %v1659
    %v1976 = vunpack.c.h.b16 %v1659
    %v1977 = vunpack.c.l.b16 %v1660
    %v1978 = vunpack.c.h.b16 %v1660
    %v1979 = vunpack.c.l.b16 %v1661
    %v1980 = vunpack.c.h.b16 %v1661
    %v1981 = vunpack.c.l.b16 %v1662
    %v1982 = vunpack.c.h.b16 %v1662
    %v1983 = vunpack.c.l.b16 %v1663
    %v1984 = vunpack.c.h.b16 %v1663
    %v1985 = vunpack.c.l.b16 %v1664
    %v1986 = vunpack.c.h.b16 %v1664
    %v1987 = vunpack.c.l.b16 %v1665
    %v1988 = vunpack.c.h.b16 %v1665
    %v1989 = vunpack.c.l.b16 %v1666
    %v1990 = vunpack.c.h.b16 %v1666
    %v1991 = vunpack.c.l.b16 %v1667
    %v1992 = vunpack.c.h.b16 %v1667
    %v1993 = vunpack.c.l.b16 %v1668
    %v1994 = vunpack.c.h.b16 %v1668
    %v1995 = vunpack.c.l.b16 %v1669
    %v1996 = vunpack.c.h.b16 %v1669
    %v1997 = vunpack.c.l.b16 %v1670
    %v1998 = vunpack.c.h.b16 %v1670
    %v1999 = vunpack.c.l.b16 %v1671
    %v2000 = vunpack.c.h.b16 %v1671
    %v2001 = vunpack.c.l.b16 %v1672
    %v2002 = vunpack.c.h.b16 %v1672
    %v2003 = vunpack.c.l.b16 %v1673
    %v2004 = vunpack.c.h.b16 %v1673
    %v2005 = vunpack.c.l.b16 %v1674
    %v2006 = vunpack.c.h.b16 %v1674
    %v2007 = vunpack.c.l.b16 %v1675
    %v2008 = vunpack.c.h.b16 %v1675
    %v2009 = vunpack.c.l.b16 %v1676
    %v2010 = vunpack.c.h.b16 %v1676
    %v2011 = vunpack.c.l.b16 %v1677
    %v2012 = vunpack.c.h.b16 %v1677
    %v2013 = vunpack.c.l.b16 %v1678
    %v2014 = vunpack.c.h.b16 %v1678
    %v2015 = vunpack.c.l.b16 %v1679
    %v2016 = vunpack.c.h.b16 %v1679
    %v2017 = vunpack.c.l.b16 %v1680
    %v2018 = vunpack.c.h.b16 %v1680
    %v2019 = vunpack.c.l.b16 %v1681
    %v2020 = vunpack.c.h.b16 %v1681
    %v2021 = vunpack.c.l.b16 %v1682
    %v2022 = vunpack.c.h.b16 %v1682
    %v2023 = vunpack.c.l.b16 %v1683
    %v2024 = vunpack.c.h.b16 %v1683
    %v2025 = vunpack.c.l.b16 %v1684
    %v2026 = vunpack.c.h.b16 %v1684
    %v2027 = vunpack.c.l.b16 %v1685
    %v2028 = vunpack.c.h.b16 %v1685
    %v2029 = vunpack.c.l.b16 %v1686
    %v2030 = vunpack.c.h.b16 %v1686
    %v2031 = vunpack.c.l.b16 %v1687
    %v2032 = vunpack.c.h.b16 %v1687
    %v2033 = vunpack.c.l.b16 %v1688
    %v2034 = vunpack.c.h.b16 %v1688
    %v2035 = vunpack.c.l.b16 %v1689
    %v2036 = vunpack.c.h.b16 %v1689
    %v2037 = vunpack.c.l.b16 %v1690
    %v2038 = vunpack.c.h.b16 %v1690
    %v2039 = vunpack.c.l.b16 %v1691
    %v2040 = vunpack.c.h.b16 %v1691
    %v2041 = vunpack.c.l.b16 %v1692
    %v2042 = vunpack.c.h.b16 %v1692
    %v2043 = vunpack.c.l.b16 %v1693
    %v2044 = vunpack.c.h.b16 %v1693
    %v2045 = vunpack.c.l.b16 %v1694
    %v2046 = vunpack.c.h.b16 %v1694
    %v2047 = vunpack.c.l.b16 %v1695
    %v2048 = vunpack.c.h.b16 %v1695
    %v2049 = vunpack.c.l.b16 %v1696
    %v2050 = vunpack.c.h.b16 %v1696
    %v2051 = vunpack.c.l.b16 %v1697
    %v2052 = vunpack.c.h.b16 %v1697
    %v2053 = vunpack.c.l.b16 %v1698
    %v2054 = vunpack.c.h.b16 %v1698
    %v2055 = vunpack.c.l.b16 %v1699
    %v2056 = vunpack.c.h.b16 %v1699
    %v2057 = vunpack.c.l.b16 %v1700
    %v2058 = vunpack.c.h.b16 %v1700
    %v2059 = vunpack.c.l.b16 %v1701
    %v2060 = vunpack.c.h.b16 %v1701
    %v2061 = vunpack.c.l.b16 %v1702
    %v2062 = vunpack.c.h.b16 %v1702
    %v2063 = vunpack.c.l.b16 %v1703
    %v2064 = vunpack.c.h.b16 %v1703
    %v2065 = vunpack.c.l.b16 %v1704
    %v2066 = vunpack.c.h.b16 %v1704
    %v2067 = vunpack.c.l.b16 %v1705
    %v2068 = vunpack.c.h.b16 %v1705
    %v2069 = vunpack.c.l.b16 %v1706
    %v2070 = vunpack.c.h.b16 %v1706
    %v2071 = vunpack.c.l.b16 %v1707
    %v2072 = vunpack.c.h.b16 %v1707
    %v2073 = vunpack.c.l.b16 %v1708
    %v2074 = vunpack.c.h.b16 %v1708
    %v2075 = vunpack.c.l.b16 %v1709
    %v2076 = vunpack.c.h.b16 %v1709
    %v2077 = vunpack.c.l.b16 %v1710
    %v2078 = vunpack.c.h.b16 %v1710
    %v2079 = vunpack.c.l.b16 %v1711
    %v2080 = vunpack.c.h.b16 %v1711
    %v2081 = vunpack.c.l.b16 %v1712
    %v2082 = vunpack.c.h.b16 %v1712
    %v2083 = vunpack.c.l.b16 %v1713
    %v2084 = vunpack.c.h.b16 %v1713
    %v2085 = vunpack.c.l.b16 %v1714
    %v2086 = vunpack.c.h.b16 %v1714
    %v2087 = vunpack.c.l.b16 %v1715
    %v2088 = vunpack.c.h.b16 %v1715
    %v2089 = vunpack.c.l.b16 %v1716
    %v2090 = vunpack.c.h.b16 %v1716
    %v2091 = vunpack.c.l.b16 %v1717
    %v2092 = vunpack.c.h.b16 %v1717
    %v2093 = vunpack.c.l.b16 %v1718
    %v2094 = vunpack.c.h.b16 %v1718
    %v2095 = vunpack.c.l.b16 %v1719
    %v2096 = vunpack.c.h.b16 %v1719
    %v2097 = vunpack.c.l.b16 %v1720
    %v2098 = vunpack.c.h.b16 %v1720
    %v2099 = vunpack.c.l.b16 %v1721
    %v2100 = vunpack.c.h.b16 %v1721
    %v2101 = vunpack.c.l.b16 %v1722
    %v2102 = vunpack.c.h.b16 %v1722
    %v2103 = vunpack.c.l.b16 %v1723
    %v2104 = vunpack.c.h.b16 %v1723
    %v2105 = vunpack.c.l.b16 %v1724
    %v2106 = vunpack.c.h.b16 %v1724
    %v2107 = vunpack.c.l.b16 %v1725
    %v2108 = vunpack.c.h.b16 %v1725
    %v2109 = vunpack.c.l.b16 %v1726
    %v2110 = vunpack.c.h.b16 %v1726
    %v2111 = vunpack.c.l.b16 %v1727
    %v2112 = vunpack.c.h.b16 %v1727
    %v2113 = vunpack.c.l.b16 %v1728
    %v2114 = vunpack.c.h.b16 %v1728
    %v2115 = vunpack.c.l.b16 %v1729
    %v2116 = vunpack.c.h.b16 %v1729
    %v2117 = vunpack.c.l.b16 %v1730
    %v2118 = vunpack.c.h.b16 %v1730
    %v2119 = vunpack.c.l.b16 %v1731
    %v2120 = vunpack.c.h.b16 %v1731
    %v2121 = vunpack.c.l.b16 %v1732
    %v2122 = vunpack.c.h.b16 %v1732
    %v2123 = vunpack.c.l.b16 %v1733
    %v2124 = vunpack.c.h.b16 %v1733
    %v2125 = vunpack.c.l.b16 %v1734
    %v2126 = vunpack.c.h.b16 %v1734
    %v2127 = vunpack.c.l.b16 %v1735
    %v2128 = vunpack.c.h.b16 %v1735
    %v2129 = vunpack.c.l.b16 %v1736
    %v2130 = vunpack.c.h.b16 %v1736
    %v2131 = vunpack.c.l.b16 %v1737
    %v2132 = vunpack.c.h.b16 %v1737
    %v2133 = vunpack.c.l.b16 %v1738
    %v2134 = vunpack.c.h.b16 %v1738
    %v2135 = vunpack.c.l.b16 %v1739
    %v2136 = vunpack.c.h.b16 %v1739
    %v2137 = vunpack.c.l.b16 %v1740
    %v2138 = vunpack.c.h.b16 %v1740
    %v2139 = vunpack.c.l.b16 %v1741
    %v2140 = vunpack.c.h.b16 %v1741
    %v2141 = vunpack.c.l.b16 %v1742
    %v2142 = vunpack.c.h.b16 %v1742
    %v2143 = vunpack.c.l.b16 %v1743
    %v2144 = vunpack.c.h.b16 %v1743
    %v2145 = vunpack.c.l.b16 %v1744
    %v2146 = vunpack.c.h.b16 %v1744
    %v2147 = vunpack.c.l.b16 %v1745
    %v2148 = vunpack.c.h.b16 %v1745
    %v2149 = vunpack.c.l.b16 %v1746
    %v2150 = vunpack.c.h.b16 %v1746
    %v2151 = vunpack.c.l.b16 %v1747
    %v2152 = vunpack.c.h.b16 %v1747
    %v2153 = vunpack.c.l.b16 %v1748
    %v2154 = vunpack.c.h.b16 %v1748
    %v2155 = vpack.c.b16 %v1903, %v1899
    %v2156 = vpack.c.b16 %v1904, %v1900
    %v2157 = vpack.c.b16 %v1905, %v1901
    %v2158 = vpack.c.b16 %v1906, %v1902
    %v2159 = vpack.c.b16 %v1911, %v1907
    %v2160 = vpack.c.b16 %v1912, %v1908
    %v2161 = vpack.c.b16 %v1913, %v1909
    %v2162 = vpack.c.b16 %v1914, %v1910
    %v2163 = vpack.c.b16 %v1919, %v1915
    %v2164 = vpack.c.b16 %v1920, %v1916
    %v2165 = vpack.c.b16 %v1921, %v1917
    %v2166 = vpack.c.b16 %v1922, %v1918
    %v2167 = vpack.c.b16 %v1927, %v1923
    %v2168 = vpack.c.b16 %v1928, %v1924
    %v2169 = vpack.c.b16 %v1929, %v1925
    %v2170 = vpack.c.b16 %v1930, %v1926
    %v2171 = vpack.c.b16 %v1935, %v1931
    %v2172 = vpack.c.b16 %v1936, %v1932
    %v2173 = vpack.c.b16 %v1937, %v1933
    %v2174 = vpack.c.b16 %v1938, %v1934
    %v2175 = vpack.c.b16 %v1943, %v1939
    %v2176 = vpack.c.b16 %v1944, %v1940
    %v2177 = vpack.c.b16 %v1945, %v1941
    %v2178 = vpack.c.b16 %v1946, %v1942
    %v2179 = vpack.c.b16 %v1951, %v1947
    %v2180 = vpack.c.b16 %v1952, %v1948
    %v2181 = vpack.c.b16 %v1953, %v1949
    %v2182 = vpack.c.b16 %v1954, %v1950
    %v2183 = vpack.c.b16 %v1959, %v1955
    %v2184 = vpack.c.b16 %v1960, %v1956
    %v2185 = vpack.c.b16 %v1961, %v1957
    %v2186 = vpack.c.b16 %v1962, %v1958
    %v2187 = vpack.c.b16 %v1967, %v1963
    %v2188 = vpack.c.b16 %v1968, %v1964
    %v2189 = vpack.c.b16 %v1969, %v1965
    %v2190 = vpack.c.b16 %v1970, %v1966
    %v2191 = vpack.c.b16 %v1975, %v1971
    %v2192 = vpack.c.b16 %v1976, %v1972
    %v2193 = vpack.c.b16 %v1977, %v1973
    %v2194 = vpack.c.b16 %v1978, %v1974
    %v2195 = vpack.c.b16 %v1983, %v1979
    %v2196 = vpack.c.b16 %v1984, %v1980
    %v2197 = vpack.c.b16 %v1985, %v1981
    %v2198 = vpack.c.b16 %v1986, %v1982
    %v2199 = vpack.c.b16 %v1991, %v1987
    %v2200 = vpack.c.b16 %v1992, %v1988
    %v2201 = vpack.c.b16 %v1993, %v1989
    %v2202 = vpack.c.b16 %v1994, %v1990
    %v2203 = vpack.c.b16 %v1999, %v1995
    %v2204 = vpack.c.b16 %v2000, %v1996
    %v2205 = vpack.c.b16 %v2001, %v1997
    %v2206 = vpack.c.b16 %v2002, %v1998
    %v2207 = vpack.c.b16 %v2007, %v2003
    %v2208 = vpack.c.b16 %v2008, %v2004
    %v2209 = vpack.c.b16 %v2009, %v2005
    %v2210 = vpack.c.b16 %v2010, %v2006
    %v2211 = vpack.c.b16 %v2015, %v2011
    %v2212 = vpack.c.b16 %v2016, %v2012
    %v2213 = vpack.c.b16 %v2017, %v2013
    %v2214 = vpack.c.b16 %v2018, %v2014
    %v2215 = vpack.c.b16 %v2023, %v2019
    %v2216 = vpack.c.b16 %v2024, %v2020
    %v2217 = vpack.c.b16 %v2025, %v2021
    %v2218 = vpack.c.b16 %v2026, %v2022
    %v2219 = vpack.c.b16 %v2031, %v2027
    %v2220 = vpack.c.b16 %v2032, %v2028
    %v2221 = vpack.c.b16 %v2033, %v2029
    %v2222 = vpack.c.b16 %v2034, %v2030
    %v2223 = vpack.c.b16 %v2039, %v2035
    %v2224 = vpack.c.b16 %v2040, %v2036
    %v2225 = vpack.c.b16 %v2041, %v2037
    %v2226 = vpack.c.b16 %v2042, %v2038
    %v2227 = vpack.c.b16 %v2047, %v2043
    %v2228 = vpack.c.b16 %v2048, %v2044
    %v2229 = vpack.c.b16 %v2049, %v2045
    %v2230 = vpack.c.b16 %v2050, %v2046
    %v2231 = vpack.c.b16 %v2055, %v2051
    %v2232 = vpack.c.b16 %v2056, %v2052
    %v2233 = vpack.c.b16 %v2057, %v2053
    %v2234 = vpack.c.b16 %v2058, %v2054
    %v2235 = vpack.c.b16 %v2063, %v2059
    %v2236 = vpack.c.b16 %v2064, %v2060
    %v2237 = vpack.c.b16 %v2065, %v2061
    %v2238 = vpack.c.b16 %v2066, %v2062
    %v2239 = vpack.c.b16 %v2071, %v2067
    %v2240 = vpack.c.b16 %v2072, %v2068
    %v2241 = vpack.c.b16 %v2073, %v2069
    %v2242 = vpack.c.b16 %v2074, %v2070
    %v2243 = vpack.c.b16 %v2079, %v2075
    %v2244 = vpack.c.b16 %v2080, %v2076
    %v2245 = vpack.c.b16 %v2081, %v2077
    %v2246 = vpack.c.b16 %v2082, %v2078
    %v2247 = vpack.c.b16 %v2087, %v2083
    %v2248 = vpack.c.b16 %v2088, %v2084
    %v2249 = vpack.c.b16 %v2089, %v2085
    %v2250 = vpack.c.b16 %v2090, %v2086
    %v2251 = vpack.c.b16 %v2095, %v2091
    %v2252 = vpack.c.b16 %v2096, %v2092
    %v2253 = vpack.c.b16 %v2097, %v2093
    %v2254 = vpack.c.b16 %v2098, %v2094
    %v2255 = vpack.c.b16 %v2103, %v2099
    %v2256 = vpack.c.b16 %v2104, %v2100
    %v2257 = vpack.c.b16 %v2105, %v2101
    %v2258 = vpack.c.b16 %v2106, %v2102
    %v2259 = vpack.c.b16 %v2111, %v2107
    %v2260 = vpack.c.b16 %v2112, %v2108
    %v2261 = vpack.c.b16 %v2113, %v2109
    %v2262 = vpack.c.b16 %v2114, %v2110
    %v2263 = vpack.c.b16 %v2119, %v2115
    %v2264 = vpack.c.b16 %v2120, %v2116
    %v2265 = vpack.c.b16 %v2121, %v2117
    %v2266 = vpack.c.b16 %v2122, %v2118
    %v2267 = vpack.c.b16 %v2127, %v2123
    %v2268 = vpack.c.b16 %v2128, %v2124
    %v2269 = vpack.c.b16 %v2129, %v2125
    %v2270 = vpack.c.b16 %v2130, %v2126
    %v2271 = vpack.c.b16 %v2135, %v2131
    %v2272 = vpack.c.b16 %v2136, %v2132
    %v2273 = vpack.c.b16 %v2137, %v2133
    %v2274 = vpack.c.b16 %v2138, %v2134
    %v2275 = vpack.c.b16 %v2143, %v2139
    %v2276 = vpack.c.b16 %v2144, %v2140
    %v2277 = vpack.c.b16 %v2145, %v2141
    %v2278 = vpack.c.b16 %v2146, %v2142
    %v2279 = vpack.c.b16 %v2151, %v2147
    %v2280 = vpack.c.b16 %v2152, %v2148
    %v2281 = vpack.c.b16 %v2153, %v2149
    %v2282 = vpack.c.b16 %v2154, %v2150
    %2411 = vmatprep.subr.bf16.mxu0 %v2156
    %2412 = vmatpush1.bf16.msra.mxu0 %v2155
    %2413 = vmatprep.subr.bf16.mxu0 %v2160
    %2414 = vmatpush1.bf16.msra.mxu0 %v2159
    %2415 = vmatprep.subr.bf16.mxu0 %v2164
    %2416 = vmatpush1.bf16.msra.mxu0 %v2163
    %2417 = vmatprep.subr.bf16.mxu0 %v2168
    %2418 = vmatpush1.bf16.msra.mxu0 %v2167
    %2419 = vmatprep.subr.bf16.mxu0 %v2172
    %2420 = vmatpush1.bf16.msra.mxu0 %v2171
    %2421 = vmatprep.subr.bf16.mxu0 %v2176
    %2422 = vmatpush1.bf16.msra.mxu0 %v2175
    %2423 = vmatprep.subr.bf16.mxu0 %v2180
    %2424 = vmatpush1.bf16.msra.mxu0 %v2179
    %2425 = vmatprep.subr.bf16.mxu0 %v2184
    %2426 = vmatpush1.bf16.msra.mxu0 %v2183
    %2427 = vmatprep.subr.bf16.mxu0 %v2188
    %2428 = vmatpush1.bf16.msra.mxu0 %v2187
    %2429 = vmatprep.subr.bf16.mxu0 %v2192
    %2430 = vmatpush1.bf16.msra.mxu0 %v2191
    %2431 = vmatprep.subr.bf16.mxu0 %v2196
    %2432 = vmatpush1.bf16.msra.mxu0 %v2195
    %2433 = vmatprep.subr.bf16.mxu0 %v2200
    %2434 = vmatpush1.bf16.msra.mxu0 %v2199
    %2435 = vmatprep.subr.bf16.mxu0 %v2204
    %2436 = vmatpush1.bf16.msra.mxu0 %v2203
    %2437 = vmatprep.subr.bf16.mxu0 %v2208
    %2438 = vmatpush1.bf16.msra.mxu0 %v2207
    %2439 = vmatprep.subr.bf16.mxu0 %v2212
    %2440 = vmatpush1.bf16.msra.mxu0 %v2211
    %2441 = vmatprep.subr.bf16.mxu0 %v2216
    %2442 = vmatpush1.bf16.msra.mxu0 %v2215
    %2443 = vmatprep.mubr.bf16.mxu0 %v1618
    %2444 = vmatmul.mubr.bf16.gmra.mrb[0].mxu0 %v1617
    %v2445 = vpop.f32.mrb[0].mxu0
    %v2446 = vadd.f32 %v1754, %v2445
    %v2447 = vpop.f32.mrb[0].mxu0
    %v2448 = vadd.f32 %v1758, %v2447
    %v2449 = vpop.f32.mrb[0].mxu0
    %v2450 = vadd.f32 %v1754, %v2449
    %v2451 = vpop.f32.mrb[0].mxu0
    %v2452 = vadd.f32 %v1758, %v2451
    %2453 = vdwg.mxu0
    %2454 = vmatprep.subr.bf16.mxu0 %v2220
    %2455 = vmatpush1.bf16.msra.mxu0 %v2219
    %2456 = vmatprep.subr.bf16.mxu0 %v2224
    %2457 = vmatpush1.bf16.msra.mxu0 %v2223
    %2458 = vmatprep.subr.bf16.mxu0 %v2228
    %2459 = vmatpush1.bf16.msra.mxu0 %v2227
    %2460 = vmatprep.subr.bf16.mxu0 %v2232
    %2461 = vmatpush1.bf16.msra.mxu0 %v2231
    %2462 = vmatprep.subr.bf16.mxu0 %v2236
    %2463 = vmatpush1.bf16.msra.mxu0 %v2235
    %2464 = vmatprep.subr.bf16.mxu0 %v2240
    %2465 = vmatpush1.bf16.msra.mxu0 %v2239
    %2466 = vmatprep.subr.bf16.mxu0 %v2244
    %2467 = vmatpush1.bf16.msra.mxu0 %v2243
    %2468 = vmatprep.subr.bf16.mxu0 %v2248
    %2469 = vmatpush1.bf16.msra.mxu0 %v2247
    %2470 = vmatprep.subr.bf16.mxu0 %v2252
    %2471 = vmatpush1.bf16.msra.mxu0 %v2251
    %2472 = vmatprep.subr.bf16.mxu0 %v2256
    %2473 = vmatpush1.bf16.msra.mxu0 %v2255
    %2474 = vmatprep.subr.bf16.mxu0 %v2260
    %2475 = vmatpush1.bf16.msra.mxu0 %v2259
    %2476 = vmatprep.subr.bf16.mxu0 %v2264
    %2477 = vmatpush1.bf16.msra.mxu0 %v2263
    %2478 = vmatprep.subr.bf16.mxu0 %v2268
    %2479 = vmatpush1.bf16.msra.mxu0 %v2267
    %2480 = vmatprep.subr.bf16.mxu0 %v2272
    %2481 = vmatpush1.bf16.msra.mxu0 %v2271
    %2482 = vmatprep.subr.bf16.mxu0 %v2276
    %2483 = vmatpush1.bf16.msra.mxu0 %v2275
    %2484 = vmatprep.subr.bf16.mxu0 %v2280
    %2485 = vmatpush1.bf16.msra.mxu0 %v2279
    %2486 = vmatprep.mubr.bf16.mxu0 %v1620
    %2487 = vmatmul.mubr.bf16.gmra.mrb[0].mxu0 %v1619
    %v2488 = vpop.f32.mrb[0].mxu0
    %v2489 = vadd.f32 %v2446, %v2488
    %v2490 = vpop.f32.mrb[0].mxu0
    %v2491 = vadd.f32 %v2448, %v2490
    %v2492 = vpop.f32.mrb[0].mxu0
    %v2493 = vadd.f32 %v2450, %v2492
    %v2494 = vpop.f32.mrb[0].mxu0
    %v2495 = vadd.f32 %v2452, %v2494
    %2496 = vdwg.mxu0
    %2497 = vmatprep.subr.bf16.mxu0 %v2158
    %2498 = vmatpush1.bf16.msra.mxu0 %v2157
    %2499 = vmatprep.subr.bf16.mxu0 %v2162
    %2500 = vmatpush1.bf16.msra.mxu0 %v2161
    %2501 = vmatprep.subr.bf16.mxu0 %v2166
    %2502 = vmatpush1.bf16.msra.mxu0 %v2165
    %2503 = vmatprep.subr.bf16.mxu0 %v2170
    %2504 = vmatpush1.bf16.msra.mxu0 %v2169
    %2505 = vmatprep.subr.bf16.mxu0 %v2174
    %2506 = vmatpush1.bf16.msra.mxu0 %v2173
    %2507 = vmatprep.subr.bf16.mxu0 %v2178
    %2508 = vmatpush1.bf16.msra.mxu0 %v2177
    %2509 = vmatprep.subr.bf16.mxu0 %v2182
    %2510 = vmatpush1.bf16.msra.mxu0 %v2181
    %2511 = vmatprep.subr.bf16.mxu0 %v2186
    %2512 = vmatpush1.bf16.msra.mxu0 %v2185
    %2513 = vmatprep.subr.bf16.mxu0 %v2190
    %2514 = vmatpush1.bf16.msra.mxu0 %v2189
    %2515 = vmatprep.subr.bf16.mxu0 %v2194
    %2516 = vmatpush1.bf16.msra.mxu0 %v2193
    %2517 = vmatprep.subr.bf16.mxu0 %v2198
    %2518 = vmatpush1.bf16.msra.mxu0 %v2197
    %2519 = vmatprep.subr.bf16.mxu0 %v2202
    %2520 = vmatpush1.bf16.msra.mxu0 %v2201
    %2521 = vmatprep.subr.bf16.mxu0 %v2206
    %2522 = vmatpush1.bf16.msra.mxu0 %v2205
    %2523 = vmatprep.subr.bf16.mxu0 %v2210
    %2524 = vmatpush1.bf16.msra.mxu0 %v2209
    %2525 = vmatprep.subr.bf16.mxu0 %v2214
    %2526 = vmatpush1.bf16.msra.mxu0 %v2213
    %2527 = vmatprep.subr.bf16.mxu0 %v2218
    %2528 = vmatpush1.bf16.msra.mxu0 %v2217
    %2529 = vmatprep.mubr.bf16.mxu0 %v1618
    %2530 = vmatmul.mubr.bf16.gmra.mrb[0].mxu0 %v1617
    %v2531 = vpop.f32.mrb[0].mxu0
    %v2532 = vadd.f32 %v1762, %v2531
    %v2533 = vpop.f32.mrb[0].mxu0
    %v2534 = vadd.f32 %v1766, %v2533
    %v2535 = vpop.f32.mrb[0].mxu0
    %v2536 = vadd.f32 %v1762, %v2535
    %v2537 = vpop.f32.mrb[0].mxu0
    %v2538 = vadd.f32 %v1766, %v2537
    %2539 = vdwg.mxu0
    %2540 = vmatprep.subr.bf16.mxu0 %v2222
    %2541 = vmatpush1.bf16.msra.mxu0 %v2221
    %2542 = vmatprep.subr.bf16.mxu0 %v2226
    %2543 = vmatpush1.bf16.msra.mxu0 %v2225
    %2544 = vmatprep.subr.bf16.mxu0 %v2230
    %2545 = vmatpush1.bf16.msra.mxu0 %v2229
    %2546 = vmatprep.subr.bf16.mxu0 %v2234
    %2547 = vmatpush1.bf16.msra.mxu0 %v2233
    %2548 = vmatprep.subr.bf16.mxu0 %v2238
    %2549 = vmatpush1.bf16.msra.mxu0 %v2237
    %2550 = vmatprep.subr.bf16.mxu0 %v2242
    %2551 = vmatpush1.bf16.msra.mxu0 %v2241
    %2552 = vmatprep.subr.bf16.mxu0 %v2246
    %2553 = vmatpush1.bf16.msra.mxu0 %v2245
    %2554 = vmatprep.subr.bf16.mxu0 %v2250
    %2555 = vmatpush1.bf16.msra.mxu0 %v2249
    %2556 = vmatprep.subr.bf16.mxu0 %v2254
    %2557 = vmatpush1.bf16.msra.mxu0 %v2253
    %2558 = vmatprep.subr.bf16.mxu0 %v2258
    %2559 = vmatpush1.bf16.msra.mxu0 %v2257
    %2560 = vmatprep.subr.bf16.mxu0 %v2262
    %2561 = vmatpush1.bf16.msra.mxu0 %v2261
    %2562 = vmatprep.subr.bf16.mxu0 %v2266
    %2563 = vmatpush1.bf16.msra.mxu0 %v2265
    %2564 = vmatprep.subr.bf16.mxu0 %v2270
    %2565 = vmatpush1.bf16.msra.mxu0 %v2269
    %2566 = vmatprep.subr.bf16.mxu0 %v2274
    %2567 = vmatpush1.bf16.msra.mxu0 %v2273
    %2568 = vmatprep.subr.bf16.mxu0 %v2278
    %2569 = vmatpush1.bf16.msra.mxu0 %v2277
    %2570 = vmatprep.subr.bf16.mxu0 %v2282
    %2571 = vmatpush1.bf16.msra.mxu0 %v2281
    %2572 = vmatprep.mubr.bf16.mxu0 %v1620
    %2573 = vmatmul.mubr.bf16.gmra.mrb[0].mxu0 %v1619
    %v2574 = vpop.f32.mrb[0].mxu0
    %v2575 = vadd.f32 %v2532, %v2574
    %v2576 = vpop.f32.mrb[0].mxu0
    %v2577 = vadd.f32 %v2534, %v2576
    %v2578 = vpop.f32.mrb[0].mxu0
    %v2579 = vadd.f32 %v2536, %v2578
    %v2580 = vpop.f32.mrb[0].mxu0
    %v2581 = vadd.f32 %v2538, %v2580
    %2582 = vdwg.mxu0
    %vm2583 = vcmp.gt.f32.partialorder %v2489, 0.0
    %vm2584 = vcmp.gt.f32.partialorder %v2491, 0.0
    %vm2585 = vcmp.gt.f32.partialorder %v2575, 0.0
    %vm2586 = vcmp.gt.f32.partialorder %v2577, 0.0
    %vm2587 = vcmp.gt.f32.partialorder %v2493, 0.0
    %vm2588 = vcmp.gt.f32.partialorder %v2495, 0.0
    %vm2589 = vcmp.gt.f32.partialorder %v2579, 0.0
    %vm2590 = vcmp.gt.f32.partialorder %v2581, 0.0
    %v2591 = vmul.f32 %v2489, 0.2
    %v2592 = vmul.f32 %v2491, 0.2
    %v2593 = vmul.f32 %v2575, 0.2
    %v2594 = vmul.f32 %v2577, 0.2
    %v2595 = vmul.f32 %v2493, 0.2
    %v2596 = vmul.f32 %v2495, 0.2
    %v2597 = vmul.f32 %v2579, 0.2
    %v2598 = vmul.f32 %v2581, 0.2
    %v2599 = vsel %vm2583, %v2489, %v2591
    %v2600 = vsel %vm2584, %v2491, %v2592
    %v2601 = vsel %vm2585, %v2575, %v2593
    %v2602 = vsel %vm2586, %v2577, %v2594
    %v2603 = vsel %vm2587, %v2493, %v2595
    %v2604 = vsel %vm2588, %v2495, %v2596
    %v2605 = vsel %vm2589, %v2579, %v2597
    %v2606 = vsel %vm2590, %v2581, %v2598
    %v2607 = vld [vmem:[%s1] sm:$0xff]
    %v2608 = vld [vmem:[%s1 + $0x8] sm:$0xff]
    %v2609 = vlaneseq
    %v2610 = vand.u32 %v2609, 127
    %2611 = vset.pattern.permute.xlu0 0
    %2612 = vperm.xlu0 %2611, %v2607
    %v2613 = vpop.permute.xlu0 %2612
    %2614 = vset.pattern.permute.xlu0 0
    %2615 = vperm.xlu0 %2614, %v2608
    %v2616 = vpop.permute.xlu0 %2615
    %vm2617 = vcmp.eq.s32.totalorder %v2613, %v2610
    %vm2618 = vcmp.eq.s32.totalorder %v2616, %v2610
    %v2619 = vsel %vm2617, 1, 0
    %v2620 = vsel %vm2618, 1, 0
    %v2621 = vcvt.s32.f32 %v2619
    %v2622 = vcvt.s32.f32 %v2620
    %v2623 = vld [vmem:[%s9] sm:$0xff]
    %v2624 = vld [vmem:[%s9 + $0x8] sm:$0xff]
    %vm2625 = vcmask 130048
    %v2627 = vsel %vm2625, %v2621, 0
    %v2630 = vsel %vm2625, %v2622, 0
    %2632 = vmatprep.subr.mxu0 0.0
    %2633 = vmatpush1.msra.mxu0 %v2623
    %2634 = vmatprep.subr.mxu0 0.0
    %2635 = vmatpush1.msra.mxu0 %v2624
    %2636 = vmatprep.subr.mxu0 0.0
    %2637 = vmatpush1.msra.mxu0 0.0
    %2638 = vmatprep.subr.mxu0 0.0
    %2639 = vmatpush1.msra.mxu0 0.0
    %2640 = vmatprep.subr.mxu0 0.0
    %2641 = vmatpush1.msra.mxu0 0.0
    %2642 = vmatprep.subr.mxu0 0.0
    %2643 = vmatpush1.msra.mxu0 0.0
    %2644 = vmatprep.subr.mxu0 0.0
    %2645 = vmatpush1.msra.mxu0 0.0
    %2646 = vmatprep.subr.mxu0 0.0
    %2647 = vmatpush1.msra.mxu0 0.0
    %2648 = vmatprep.subr.mxu0 0.0
    %2649 = vmatpush1.msra.mxu0 0.0
    %2650 = vmatprep.subr.mxu0 0.0
    %2651 = vmatpush1.msra.mxu0 0.0
    %2652 = vmatprep.subr.mxu0 0.0
    %2653 = vmatpush1.msra.mxu0 0.0
    %2654 = vmatprep.subr.mxu0 0.0
    %2655 = vmatpush1.msra.mxu0 0.0
    %2656 = vmatprep.subr.mxu0 0.0
    %2657 = vmatpush1.msra.mxu0 0.0
    %2658 = vmatprep.subr.mxu0 0.0
    %2659 = vmatpush1.msra.mxu0 0.0
    %2660 = vmatprep.subr.mxu0 0.0
    %2661 = vmatpush1.msra.mxu0 0.0
    %2662 = vmatprep.subr.mxu0 0.0
    %2663 = vmatpush1.msra.mxu0 0.0
    %2664 = vmatprep.subr.mxu0 0.0
    %2665 = vmatpush1.msra.mxu0 0.0
    %2666 = vmatprep.subr.mxu0 0.0
    %2667 = vmatpush1.msra.mxu0 0.0
    %2668 = vmatprep.subr.mxu0 0.0
    %2669 = vmatpush1.msra.mxu0 0.0
    %2670 = vmatprep.subr.mxu0 0.0
    %2671 = vmatpush1.msra.mxu0 0.0
    %2672 = vmatprep.subr.mxu0 0.0
    %2673 = vmatpush1.msra.mxu0 0.0
    %2674 = vmatprep.subr.mxu0 0.0
    %2675 = vmatpush1.msra.mxu0 0.0
    %2676 = vmatprep.subr.mxu0 0.0
    %2677 = vmatpush1.msra.mxu0 0.0
    %2678 = vmatprep.subr.mxu0 0.0
    %2679 = vmatpush1.msra.mxu0 0.0
    %2680 = vmatprep.subr.mxu0 0.0
    %2681 = vmatpush1.msra.mxu0 0.0
    %2682 = vmatprep.subr.mxu0 0.0
    %2683 = vmatpush1.msra.mxu0 0.0
    %2684 = vmatprep.subr.mxu0 0.0
    %2685 = vmatpush1.msra.mxu0 0.0
    %2686 = vmatprep.subr.mxu0 0.0
    %2687 = vmatpush1.msra.mxu0 0.0
    %2688 = vmatprep.subr.mxu0 0.0
    %2689 = vmatpush1.msra.mxu0 0.0
    %2690 = vmatprep.subr.mxu0 0.0
    %2691 = vmatpush1.msra.mxu0 0.0
    %2692 = vmatprep.subr.mxu0 0.0
    %2693 = vmatpush1.msra.mxu0 0.0
    %2694 = vmatprep.subr.mxu0 0.0
    %2695 = vmatpush1.msra.mxu0 0.0
    %2696 = vmatprep.mubr.f32.mxu0 0.0
    %2697 = vmatmul.mubr.f32.gmra.mrb[0].mxu0 %v2627
    %v2698 = vpop.f32.mrb[0].mxu0
    %v2699 = vadd.f32 0.0, %v2698
    %v2700 = vpop.f32.mrb[0].mxu0
    %2701 = vmatprep.mubr.f32.mxu0 0.0
    %2702 = vmatmul.mubr.f32.gmra.mrb[0].mxu0 %v2630
    %v2703 = vpop.f32.mrb[0].mxu0
    %v2704 = vadd.f32 0.0, %v2703
    %v2705 = vpop.f32.mrb[0].mxu0
    %2706 = vdwg.mxu0
    %v2707 = vpack.c.bf16 %v2603, %v2599
    %v2708 = vpack.c.bf16 %v2604, %v2600
    %v2709 = vpack.c.bf16 %v2605, %v2601
    %v2710 = vpack.c.bf16 %v2606, %v2602
    %v2711 = vld [vmem:[#allocation10] sm:$0xf]
    %v2712 = vld [vmem:[#allocation10 + $0x4] sm:$0xf]
    %v2713 = vld [vmem:[#allocation10 + $0x8] sm:$0xf]
    %v2714 = vld [vmem:[#allocation10 + $0xc] sm:$0xf]
    %v2715 = vld [vmem:[#allocation10 + $0x10] sm:$0xf]
    %v2716 = vld [vmem:[#allocation10 + $0x14] sm:$0xf]
    %v2717 = vld [vmem:[#allocation10 + $0x18] sm:$0xf]
    %v2718 = vld [vmem:[#allocation10 + $0x1c] sm:$0xf]
    %v2719 = vld [vmem:[#allocation10 + $0x20] sm:$0xf]
    %v2720 = vld [vmem:[#allocation10 + $0x24] sm:$0xf]
    %v2721 = vld [vmem:[#allocation10 + $0x28] sm:$0xf]
    %v2722 = vld [vmem:[#allocation10 + $0x2c] sm:$0xf]
    %v2723 = vld [vmem:[#allocation10 + $0x30] sm:$0xf]
    %v2724 = vld [vmem:[#allocation10 + $0x34] sm:$0xf]
    %v2725 = vld [vmem:[#allocation10 + $0x38] sm:$0xf]
    %v2726 = vld [vmem:[#allocation10 + $0x3c] sm:$0xf]
    %v2727 = vld [vmem:[#allocation10 + $0x40] sm:$0xf]
    %v2728 = vld [vmem:[#allocation10 + $0x44] sm:$0xf]
    %v2729 = vld [vmem:[#allocation10 + $0x48] sm:$0xf]
    %v2730 = vld [vmem:[#allocation10 + $0x4c] sm:$0xf]
    %v2731 = vld [vmem:[#allocation10 + $0x50] sm:$0xf]
    %v2732 = vld [vmem:[#allocation10 + $0x54] sm:$0xf]
    %v2733 = vld [vmem:[#allocation10 + $0x58] sm:$0xf]
    %v2734 = vld [vmem:[#allocation10 + $0x5c] sm:$0xf]
    %v2735 = vld [vmem:[#allocation10 + $0x60] sm:$0xf]
    %v2736 = vld [vmem:[#allocation10 + $0x64] sm:$0xf]
    %v2737 = vld [vmem:[#allocation10 + $0x68] sm:$0xf]
    %v2738 = vld [vmem:[#allocation10 + $0x6c] sm:$0xf]
    %v2739 = vld [vmem:[#allocation10 + $0x70] sm:$0xf]
    %v2740 = vld [vmem:[#allocation10 + $0x74] sm:$0xf]
    %v2741 = vld [vmem:[#allocation10 + $0x78] sm:$0xf]
    %v2742 = vld [vmem:[#allocation10 + $0x7c] sm:$0xf]
    %v2743 = vld [vmem:[#allocation10 + $0x80] sm:$0xf]
    %v2744 = vld [vmem:[#allocation10 + $0x84] sm:$0xf]
    %v2745 = vld [vmem:[#allocation10 + $0x88] sm:$0xf]
    %v2746 = vld [vmem:[#allocation10 + $0x8c] sm:$0xf]
    %v2747 = vld [vmem:[#allocation10 + $0x90] sm:$0xf]
    %v2748 = vld [vmem:[#allocation10 + $0x94] sm:$0xf]
    %v2749 = vld [vmem:[#allocation10 + $0x98] sm:$0xf]
    %v2750 = vld [vmem:[#allocation10 + $0x9c] sm:$0xf]
    %v2751 = vld [vmem:[#allocation10 + $0xa0] sm:$0xf]
    %v2752 = vld [vmem:[#allocation10 + $0xa4] sm:$0xf]
    %v2753 = vld [vmem:[#allocation10 + $0xa8] sm:$0xf]
    %v2754 = vld [vmem:[#allocation10 + $0xac] sm:$0xf]
    %v2755 = vld [vmem:[#allocation10 + $0xb0] sm:$0xf]
    %v2756 = vld [vmem:[#allocation10 + $0xb4] sm:$0xf]
    %v2757 = vld [vmem:[#allocation10 + $0xb8] sm:$0xf]
    %v2758 = vld [vmem:[#allocation10 + $0xbc] sm:$0xf]
    %v2759 = vld [vmem:[#allocation10 + $0xc0] sm:$0xf]
    %v2760 = vld [vmem:[#allocation10 + $0xc4] sm:$0xf]
    %v2761 = vld [vmem:[#allocation10 + $0xc8] sm:$0xf]
    %v2762 = vld [vmem:[#allocation10 + $0xcc] sm:$0xf]
    %v2763 = vld [vmem:[#allocation10 + $0xd0] sm:$0xf]
    %v2764 = vld [vmem:[#allocation10 + $0xd4] sm:$0xf]
    %v2765 = vld [vmem:[#allocation10 + $0xd8] sm:$0xf]
    %v2766 = vld [vmem:[#allocation10 + $0xdc] sm:$0xf]
    %v2767 = vld [vmem:[#allocation10 + $0xe0] sm:$0xf]
    %v2768 = vld [vmem:[#allocation10 + $0xe4] sm:$0xf]
    %v2769 = vld [vmem:[#allocation10 + $0xe8] sm:$0xf]
    %v2770 = vld [vmem:[#allocation10 + $0xec] sm:$0xf]
    %v2771 = vld [vmem:[#allocation10 + $0xf0] sm:$0xf]
    %v2772 = vld [vmem:[#allocation10 + $0xf4] sm:$0xf]
    %v2773 = vld [vmem:[#allocation10 + $0xf8] sm:$0xf]
    %v2774 = vld [vmem:[#allocation10 + $0xfc] sm:$0xf]
    %v2839 = vunpack.c.l.b16 %v2711
    %v2840 = vunpack.c.l.b16 %v2712
    %v2841 = vunpack.c.l.b16 %v2713
    %v2842 = vunpack.c.l.b16 %v2714
    %v2843 = vunpack.c.l.b16 %v2715
    %v2844 = vunpack.c.l.b16 %v2716
    %v2845 = vunpack.c.l.b16 %v2717
    %v2846 = vunpack.c.l.b16 %v2718
    %v2847 = vunpack.c.l.b16 %v2719
    %v2848 = vunpack.c.l.b16 %v2720
    %v2849 = vunpack.c.l.b16 %v2721
    %v2850 = vunpack.c.l.b16 %v2722
    %v2851 = vunpack.c.l.b16 %v2723
    %v2852 = vunpack.c.l.b16 %v2724
    %v2853 = vunpack.c.l.b16 %v2725
    %v2854 = vunpack.c.l.b16 %v2726
    %v2855 = vunpack.c.l.b16 %v2727
    %v2856 = vunpack.c.l.b16 %v2728
    %v2857 = vunpack.c.l.b16 %v2729
    %v2858 = vunpack.c.l.b16 %v2730
    %v2859 = vunpack.c.l.b16 %v2731
    %v2860 = vunpack.c.l.b16 %v2732
    %v2861 = vunpack.c.l.b16 %v2733
    %v2862 = vunpack.c.l.b16 %v2734
    %v2863 = vunpack.c.l.b16 %v2735
    %v2864 = vunpack.c.l.b16 %v2736
    %v2865 = vunpack.c.l.b16 %v2737
    %v2866 = vunpack.c.l.b16 %v2738
    %v2867 = vunpack.c.l.b16 %v2739
    %v2868 = vunpack.c.l.b16 %v2740
    %v2869 = vunpack.c.l.b16 %v2741
    %v2870 = vunpack.c.l.b16 %v2742
    %v2871 = vunpack.c.l.b16 %v2743
    %v2872 = vunpack.c.l.b16 %v2744
    %v2873 = vunpack.c.l.b16 %v2745
    %v2874 = vunpack.c.l.b16 %v2746
    %v2875 = vunpack.c.l.b16 %v2747
    %v2876 = vunpack.c.l.b16 %v2748
    %v2877 = vunpack.c.l.b16 %v2749
    %v2878 = vunpack.c.l.b16 %v2750
    %v2879 = vunpack.c.l.b16 %v2751
    %v2880 = vunpack.c.l.b16 %v2752
    %v2881 = vunpack.c.l.b16 %v2753
    %v2882 = vunpack.c.l.b16 %v2754
    %v2883 = vunpack.c.l.b16 %v2755
    %v2884 = vunpack.c.l.b16 %v2756
    %v2885 = vunpack.c.l.b16 %v2757
    %v2886 = vunpack.c.l.b16 %v2758
    %v2887 = vunpack.c.l.b16 %v2759
    %v2888 = vunpack.c.l.b16 %v2760
    %v2889 = vunpack.c.l.b16 %v2761
    %v2890 = vunpack.c.l.b16 %v2762
    %v2891 = vunpack.c.l.b16 %v2763
    %v2892 = vunpack.c.l.b16 %v2764
    %v2893 = vunpack.c.l.b16 %v2765
    %v2894 = vunpack.c.l.b16 %v2766
    %v2895 = vunpack.c.l.b16 %v2767
    %v2896 = vunpack.c.l.b16 %v2768
    %v2897 = vunpack.c.l.b16 %v2769
    %v2898 = vunpack.c.l.b16 %v2770
    %v2899 = vunpack.c.l.b16 %v2771
    %v2900 = vunpack.c.l.b16 %v2772
    %v2901 = vunpack.c.l.b16 %v2773
    %v2902 = vunpack.c.l.b16 %v2774
    %v2903 = vpack.c.b16 %v2840, %v2839
    %v2904 = vpack.c.b16 %v2842, %v2841
    %v2905 = vpack.c.b16 %v2844, %v2843
    %v2906 = vpack.c.b16 %v2846, %v2845
    %v2907 = vpack.c.b16 %v2848, %v2847
    %v2908 = vpack.c.b16 %v2850, %v2849
    %v2909 = vpack.c.b16 %v2852, %v2851
    %v2910 = vpack.c.b16 %v2854, %v2853
    %v2911 = vpack.c.b16 %v2856, %v2855
    %v2912 = vpack.c.b16 %v2858, %v2857
    %v2913 = vpack.c.b16 %v2860, %v2859
    %v2914 = vpack.c.b16 %v2862, %v2861
    %v2915 = vpack.c.b16 %v2864, %v2863
    %v2916 = vpack.c.b16 %v2866, %v2865
    %v2917 = vpack.c.b16 %v2868, %v2867
    %v2918 = vpack.c.b16 %v2870, %v2869
    %v2919 = vpack.c.b16 %v2872, %v2871
    %v2920 = vpack.c.b16 %v2874, %v2873
    %v2921 = vpack.c.b16 %v2876, %v2875
    %v2922 = vpack.c.b16 %v2878, %v2877
    %v2923 = vpack.c.b16 %v2880, %v2879
    %v2924 = vpack.c.b16 %v2882, %v2881
    %v2925 = vpack.c.b16 %v2884, %v2883
    %v2926 = vpack.c.b16 %v2886, %v2885
    %v2927 = vpack.c.b16 %v2888, %v2887
    %v2928 = vpack.c.b16 %v2890, %v2889
    %v2929 = vpack.c.b16 %v2892, %v2891
    %v2930 = vpack.c.b16 %v2894, %v2893
    %v2931 = vpack.c.b16 %v2896, %v2895
    %v2932 = vpack.c.b16 %v2898, %v2897
    %v2933 = vpack.c.b16 %v2900, %v2899
    %v2934 = vpack.c.b16 %v2902, %v2901
    %2967 = vmatprep.subr.bf16.mxu0 0
    %2968 = vmatpush1.bf16.msra.mxu0 %v2903
    %2969 = vmatprep.subr.bf16.mxu0 0
    %2970 = vmatpush1.bf16.msra.mxu0 %v2904
    %2971 = vmatprep.subr.bf16.mxu0 0
    %2972 = vmatpush1.bf16.msra.mxu0 %v2905
    %2973 = vmatprep.subr.bf16.mxu0 0
    %2974 = vmatpush1.bf16.msra.mxu0 %v2906
    %2975 = vmatprep.subr.bf16.mxu0 0
    %2976 = vmatpush1.bf16.msra.mxu0 %v2907
    %2977 = vmatprep.subr.bf16.mxu0 0
    %2978 = vmatpush1.bf16.msra.mxu0 %v2908
    %2979 = vmatprep.subr.bf16.mxu0 0
    %2980 = vmatpush1.bf16.msra.mxu0 %v2909
    %2981 = vmatprep.subr.bf16.mxu0 0
    %2982 = vmatpush1.bf16.msra.mxu0 %v2910
    %2983 = vmatprep.subr.bf16.mxu0 0
    %2984 = vmatpush1.bf16.msra.mxu0 %v2911
    %2985 = vmatprep.subr.bf16.mxu0 0
    %2986 = vmatpush1.bf16.msra.mxu0 %v2912
    %2987 = vmatprep.subr.bf16.mxu0 0
    %2988 = vmatpush1.bf16.msra.mxu0 %v2913
    %2989 = vmatprep.subr.bf16.mxu0 0
    %2990 = vmatpush1.bf16.msra.mxu0 %v2914
    %2991 = vmatprep.subr.bf16.mxu0 0
    %2992 = vmatpush1.bf16.msra.mxu0 %v2915
    %2993 = vmatprep.subr.bf16.mxu0 0
    %2994 = vmatpush1.bf16.msra.mxu0 %v2916
    %2995 = vmatprep.subr.bf16.mxu0 0
    %2996 = vmatpush1.bf16.msra.mxu0 %v2917
    %2997 = vmatprep.subr.bf16.mxu0 0
    %2998 = vmatpush1.bf16.msra.mxu0 %v2918
    %2999 = vmatprep.mubr.bf16.mxu0 %v2708
    %3000 = vmatmul.mubr.bf16.gmra.mrb[0].mxu0 %v2707
    %v3001 = vpop.f32.mrb[0].mxu0
    %v3002 = vadd.f32 %v2699, %v3001
    %v3003 = vpop.f32.mrb[0].mxu0
    %v3004 = vpop.f32.mrb[0].mxu0
    %v3005 = vadd.f32 %v2704, %v3004
    %v3006 = vpop.f32.mrb[0].mxu0
    %3007 = vdwg.mxu0
    %3008 = vmatprep.subr.bf16.mxu0 0
    %3009 = vmatpush1.bf16.msra.mxu0 %v2919
    %3010 = vmatprep.subr.bf16.mxu0 0
    %3011 = vmatpush1.bf16.msra.mxu0 %v2920
    %3012 = vmatprep.subr.bf16.mxu0 0
    %3013 = vmatpush1.bf16.msra.mxu0 %v2921
    %3014 = vmatprep.subr.bf16.mxu0 0
    %3015 = vmatpush1.bf16.msra.mxu0 %v2922
    %3016 = vmatprep.subr.bf16.mxu0 0
    %3017 = vmatpush1.bf16.msra.mxu0 %v2923
    %3018 = vmatprep.subr.bf16.mxu0 0
    %3019 = vmatpush1.bf16.msra.mxu0 %v2924
    %3020 = vmatprep.subr.bf16.mxu0 0
    %3021 = vmatpush1.bf16.msra.mxu0 %v2925
    %3022 = vmatprep.subr.bf16.mxu0 0
    %3023 = vmatpush1.bf16.msra.mxu0 %v2926
    %3024 = vmatprep.subr.bf16.mxu0 0
    %3025 = vmatpush1.bf16.msra.mxu0 %v2927
    %3026 = vmatprep.subr.bf16.mxu0 0
    %3027 = vmatpush1.bf16.msra.mxu0 %v2928
    %3028 = vmatprep.subr.bf16.mxu0 0
    %3029 = vmatpush1.bf16.msra.mxu0 %v2929
    %3030 = vmatprep.subr.bf16.mxu0 0
    %3031 = vmatpush1.bf16.msra.mxu0 %v2930
    %3032 = vmatprep.subr.bf16.mxu0 0
    %3033 = vmatpush1.bf16.msra.mxu0 %v2931
    %3034 = vmatprep.subr.bf16.mxu0 0
    %3035 = vmatpush1.bf16.msra.mxu0 %v2932
    %3036 = vmatprep.subr.bf16.mxu0 0
    %3037 = vmatpush1.bf16.msra.mxu0 %v2933
    %3038 = vmatprep.subr.bf16.mxu0 0
    %3039 = vmatpush1.bf16.msra.mxu0 %v2934
    %3040 = vmatprep.mubr.bf16.mxu0 %v2710
    %3041 = vmatmul.mubr.bf16.gmra.mrb[0].mxu0 %v2709
    %v3042 = vpop.f32.mrb[0].mxu0
    %v3043 = vadd.f32 %v3002, %v3042
    %v3044 = vpop.f32.mrb[0].mxu0
    %v3045 = vpop.f32.mrb[0].mxu0
    %v3046 = vadd.f32 %v3005, %v3045
    %v3047 = vpop.f32.mrb[0].mxu0
    %3048 = vdwg.mxu0
    %v3049 = vxor.u32 %v3043, 2147483648
    %v3050 = vxor.u32 %v3046, 2147483648
    %v3051 = vmul.f32 %v3049, 1.442695
    %v3052 = vpow.pop %v3051
    %v3053 = vmul.f32 %v3050, 1.442695
    %v3054 = vpow.pop %v3053
    %v3055 = vadd.f32 %v3052, 1.0
    %v3056 = vadd.f32 %v3054, 1.0
    %v3057 = vrcp.pop %v3055
    %v3058 = vmul.f32 1.0, %v3057
    %v3059 = vrcp.pop %v3056
    %v3060 = vmul.f32 1.0, %v3059
    %vm3061 = vcmp.ge.s32.totalorder %v2610, 1
    %vm3062 = vcmp.lt.s32.totalorder %v2610, 11
    %vm3063 = vmand %vm3061, %vm3062
    %v3064 = vsel %vm3063, %v3043, -1e+30
    %v3065 = vsel %vm3063, %v3046, -1e+30
    %3066 = vmax.xlane.f32.xlu0 %v3064
    %v3067 = vpop.xlane.xlu0 %3066
    %3068 = vmax.xlane.f32.xlu0 %v3065
    %v3069 = vpop.xlane.xlu0 %3068
    %v3070 = vsub.f32 %v3064, %v3067
    %v3071 = vsub.f32 %v3065, %v3069
    %v3072 = vmul.f32 %v3070, 1.442695
    %v3073 = vpow.pop %v3072
    %v3074 = vmul.f32 %v3071, 1.442695
    %v3075 = vpow.pop %v3074
    %3076 = vadd.xlane.f32.xlu0 %v3073
    %v3077 = vpop.xlane.xlu0 %3076
    %3078 = vadd.xlane.f32.xlu0 %v3075
    %v3079 = vpop.xlane.xlu0 %3078
    %v3080 = vrcp.pop %v3077
    %v3081 = vmul.f32 %v3073, %v3080
    %v3082 = vrcp.pop %v3079
    %v3083 = vmul.f32 %v3075, %v3082
    %vm3084 = vcmp.eq.s32.totalorder %v2610, 0
    %v3085 = vsel %vm3084, %v3058, %v3081
    %v3086 = vsel %vm3084, %v3060, %v3083
    %v3087 = vpack.c.bf16 %v3086, %v3085
    %v3089 = vunpack.c.l.b16 %v3087
    %v3090 = vunpack.c.h.b16 %v3087
    %v3091 = vpack.c.b16 %v3089, %v3089
    %v3092 = vpack.c.b16 %v3090, %v3090
    %3095 = vst [vmem:[#allocation11] sm:$0xf] %v3091
    %3096 = vst [vmem:[#allocation11 + $0x4] sm:$0xf] %v3092
    // Predicated region
    $region62: #{tpu_custom_call.1} parent=1 // pred_check
      _
    $region63: #{tpu_custom_call.1} parent=1 // pred_check_branch
      %3098 = sbr.rel (0) target = $region65
    $region64: #{tpu_custom_call.1} parent=1 // pred_region
      %s3100 = ssub.s32 128, 128
      %3101 = vsyncadd [#allocation4], %s3100
      %s3102 = sshll.u32 [#allocation11], 4
      %s3103 = int_to_ptr.vmem [resolvable:$true] %s3102
      %3108 = dma.vmem_to_hbm [thread:$0]  %s3103, 128, %s10, [#allocation4], 64, 64, 4
    $region65: #{tpu_custom_call.1} parent=1 // pred_fallthru
      _
    // Predicated region
    $region66: #{tpu_custom_call.1} parent=1 // pred_check
      _
    $region67: #{tpu_custom_call.1} parent=1 // pred_check_branch
      %3110 = sbr.rel (0) target = $region69
    $region68: #{tpu_custom_call.1} parent=1 // pred_region
      %3111 = dma.done [#allocation4], 128
    $region69: #{tpu_custom_call.1} parent=1 // pred_fallthru
      _
    %3112 = vsyncpa [#allocation3], 1
    %3113 = vsyncpa [#allocation6], 1
    %3114 = vsyncpa [#allocation9], 1
    %3115 = vsyncpa [#allocation4], 1

</llo_original>
